<compile_context>
chip_gen: v7x
topology: tpu7x:2x2x1
jax: 0.10.0
libtpu: 0.0.40
codegen_flags: <defaults>
</compile_context>

<pallas_src>
import functools

import jax
import jax.numpy as jnp
from jax.experimental import pallas as pl
from jax.experimental.pallas import tpu as pltpu


_SQRT_HALF = 0.7071067811865476  # 1/sqrt(2)
_MIB = 1024 * 1024


def _cdiv(a, b):
    return (a + b - 1) // b


def _round_up(x, m):
    return ((x + m - 1) // m) * m


def _chip_info():
    """(vmem_capacity_bytes, num_tensorcores) with safe fallbacks."""
    vmem_cap = 128 * _MIB
    num_cores = 1
    try:
        info = pltpu.get_tpu_info()
        vmem_cap = int(getattr(info, "vmem_capacity_bytes", None) or vmem_cap)
        cores = None
        for attr in ("num_cores", "tensorcore_count", "num_tensorcores", "core_count"):
            cores = getattr(info, attr, None)
            if cores:
                break
        if cores:
            num_cores = int(cores)
    except Exception:  # pragma: no cover - interpret mode / unknown chip
        pass
    # Heuristic: 64 MiB VMEM per TC is the v7x signature (2 TCs / chip).
    if num_cores <= 1 and vmem_cap <= 64 * _MIB:
        num_cores = 2
    return vmem_cap, num_cores


def _fit_tile_m(tile_m, d_model, d_ff, d_ff_chunk, x_itemsize, w_itemsize, budget_bytes, sublane):
    """Shrink tile_m until the conservative working-set estimate fits the VMEM budget."""
    # Resident constants (w1, w2, biases, LN params); assume double-buffered worst case.
    # TODO(synk): with pl.Buffered(1) on the weights this 2x factor can be dropped.
    const_bytes = 2 * (w_itemsize * 2 * d_model * d_ff + 4 * (d_ff + 3 * d_model))

    def per_tile(tm):
        io = 2 * 2 * tm * d_model * x_itemsize               # x tile + out tile, double-buffered
        interm = tm * d_ff_chunk * 4 + 4 * tm * d_model * 4  # f32 h chunk + f32 y/acc temporaries
        return io + interm

    while tile_m > sublane and const_bytes + per_tile(tile_m) > budget_bytes:
        tile_m = max(sublane, _round_up(tile_m // 2, sublane))
    return tile_m


def _ffn_kernel(x_ref, w1_ref, b1_ref, w2_ref, b2_ref, gamma_ref, beta_ref, o_ref, *,
                d_ff_chunk, n_chunks, use_tanh_gelu, mxu_dtype, gelu_dtype):
    # x_ref: (tile_m, d_model) tile of flattened rows, in the input dtype.
    x = x_ref[...]
    d_model = x.shape[-1]
    x_mxu = x.astype(mxu_dtype)          # hoisted once (MXU operand dtype; bf16-native when bf16)

    # d_ff inner split: accumulate the second matmul into an f32 register accumulator so the
    # live intermediate is only (tile_m, d_ff_chunk).  n_chunks == 1 reproduces the unchunked path.
    acc = jnp.zeros((x.shape[0], d_model), jnp.float32)
    for c in range(n_chunks):
        lo = c * d_ff_chunk
        h = jnp.dot(x_mxu, w1_ref[:, lo:lo + d_ff_chunk], preferred_element_type=jnp.float32)
        h = h + b1_ref[:, lo:lo + d_ff_chunk].astype(jnp.float32)
        h = h.astype(gelu_dtype)
        if use_tanh_gelu:
            # tanh GELU: transcendental goes to the EUP slot; math stays in gelu_dtype (bf16 when
            # the workload is bf16 -> 2x-packed VALU).
            h = jax.nn.gelu(h, approximate=True)
        else:
            # Exact erf GELU for parity with nn.GELU() (f32 math).
            h32 = h.astype(jnp.float32)
            h = (0.5 * h32 * (1.0 + jax.lax.erf(h32 * _SQRT_HALF))).astype(gelu_dtype)
        # (dropout1: identity in eval mode)
        acc = acc + jnp.dot(h.astype(w2_ref.dtype), w2_ref[lo:lo + d_ff_chunk, :],
                            preferred_element_type=jnp.float32)

    # (dropout2: identity in eval mode) + bias + residual, then LayerNorm over d_model (eps=1e-5).
    y = acc + b2_ref[...].astype(jnp.float32) + x.astype(jnp.float32)

    # One-pass LN statistics: sum and sum-of-squares together, var = E[y^2] - mean^2 (clamped).
    inv_d = 1.0 / d_model
    mean = jnp.sum(y, axis=-1, keepdims=True) * inv_d
    var = jnp.maximum(jnp.sum(y * y, axis=-1, keepdims=True) * inv_d - mean * mean, 0.0)
    out = (y - mean) * jax.lax.rsqrt(var + 1e-5)
    out = out * gamma_ref[...].astype(jnp.float32) + beta_ref[...].astype(jnp.float32)

    o_ref[...] = out.astype(o_ref.dtype)


@functools.partial(jax.jit, static_argnames=(
    "tile_m", "d_ff_chunk", "use_tanh_gelu", "low_precision", "cast_weights_bf16", "vmem_limit"))
def _ffn_impl(x, w1, b1, w2, b2, gamma, beta, *, tile_m, d_ff_chunk, use_tanh_gelu,
              low_precision, cast_weights_bf16, vmem_limit):
    batch, bands, nodes, d_model = x.shape
    d_ff = w1.shape[1]
    rows = batch * bands * nodes
    n_chunks = d_ff // d_ff_chunk

    if cast_weights_bf16:
        w1 = w1.astype(jnp.bfloat16)
        w2 = w2.astype(jnp.bfloat16)

    mxu_dtype = jnp.bfloat16 if low_precision else jnp.promote_types(x.dtype, w1.dtype)
    gelu_dtype = jnp.bfloat16 if low_precision else jnp.float32

    # No padding / extra HBM pass over x: grid uses cdiv, the partial last row-tile is handled by
    # Pallas (every op is row-independent, OOB rows are masked on writeback).
    x2d = x.reshape(rows, d_model)

    # Keep biases / norm params 2-D (1, dim) so they live cleanly in VMEM tiles.
    b1_2d = b1.reshape(1, d_ff)
    b2_2d = b2.reshape(1, d_model)
    gamma_2d = gamma.reshape(1, d_model)
    beta_2d = beta.reshape(1, d_model)

    x_isz = jnp.dtype(x.dtype).itemsize
    w_isz = jnp.dtype(w1.dtype).itemsize
    cost = pl.CostEstimate(
        flops=4 * rows * d_model * d_ff,                       # two matmuls, 2 flops/MAC
        transcendentals=rows * d_ff,                           # GELU over the (rows, d_ff) intermediate
        bytes_accessed=(2 * rows * d_model * x_isz             # x in + out
                        + 2 * d_model * d_ff * w_isz           # w1 + w2
                        + 4 * (d_ff + 3 * d_model)),           # biases + LN params
    )

    grid = (_cdiv(rows, tile_m),)

    out2d = pl.pallas_call(
        functools.partial(_ffn_kernel,
                          d_ff_chunk=d_ff_chunk, n_chunks=n_chunks,
                          use_tanh_gelu=use_tanh_gelu,
                          mxu_dtype=mxu_dtype, gelu_dtype=gelu_dtype),
        out_shape=jax.ShapeDtypeStruct((rows, d_model), x.dtype),
        grid_spec=pltpu.PrefetchScalarGridSpec(
            num_scalar_prefetch=0,
            grid=grid,
            in_specs=[
                pl.BlockSpec((tile_m, d_model), lambda i: (i, 0)),   # x rows tile
                pl.BlockSpec((d_model, d_ff), lambda i: (0, 0)),     # w1 (resident)
                pl.BlockSpec((1, d_ff), lambda i: (0, 0)),           # b1
                pl.BlockSpec((d_ff, d_model), lambda i: (0, 0)),     # w2 (resident)
                pl.BlockSpec((1, d_model), lambda i: (0, 0)),        # b2
                pl.BlockSpec((1, d_model), lambda i: (0, 0)),        # layernorm gamma
                pl.BlockSpec((1, d_model), lambda i: (0, 0)),        # layernorm beta
            ],
            out_specs=pl.BlockSpec((tile_m, d_model), lambda i: (i, 0)),
        ),
        compiler_params=pltpu.CompilerParams(
            dimension_semantics=("parallel",),
            vmem_limit_bytes=vmem_limit,
        ),
        cost_estimate=cost,
    )(x2d, w1, b1_2d, w2, b2_2d, gamma_2d, beta_2d)

    return out2d.reshape(batch, bands, nodes, d_model)


def feed_forward_network(x, w1, b1, w2, b2, gamma, beta, *,
                         tile_m=None, use_tanh_gelu=None, d_ff_chunk=None, bf16_matmul=False):
    """x: [batch, bands, nodes, d_model] -> same shape (eval-mode FFN forward).

    use_tanh_gelu=None  -> auto: tanh GELU for bf16 workloads (EUP), exact erf for f32 (parity).
    d_ff_chunk=None     -> auto: single pass for d_ff <= 2048, lane-aligned chunks beyond that.
    bf16_matmul=True    -> opt-in: cast weights (and MXU operands) to bf16, f32 accumulation.
    """
    batch, bands, nodes, d_model = x.shape
    d_ff = w1.shape[1]
    rows = batch * bands * nodes

    # --- static dtype / precision config ------------------------------------------------------
    cast_weights_bf16 = bool(bf16_matmul) and jnp.dtype(w1.dtype) != jnp.dtype(jnp.bfloat16)
    w_dtype = jnp.dtype(jnp.bfloat16) if cast_weights_bf16 else jnp.dtype(w1.dtype)
    low_precision = (w_dtype == jnp.dtype(jnp.bfloat16)
                     or jnp.dtype(x.dtype) == jnp.dtype(jnp.bfloat16))
    if use_tanh_gelu is None:
        use_tanh_gelu = low_precision   # bf16: tanh on the EUP; f32: exact erf for nn.GELU() parity

    # --- d_ff inner chunking (lane-aligned) ---------------------------------------------------
    if d_ff_chunk is None:
        d_ff_chunk = d_ff
        if d_ff > 2048:
            for c in (1024, 512, 256):
                if d_ff % c == 0:
                    d_ff_chunk = c
                    break
    else:
        d_ff_chunk = min(int(d_ff_chunk), d_ff)
        if d_ff_chunk <= 0 or d_ff % d_ff_chunk != 0 or (d_ff_chunk != d_ff and d_ff_chunk % 128 != 0):
            d_ff_chunk = d_ff   # fall back to the unchunked path if not lane-aligned / not a divisor

    # --- generation-aware tile selection ------------------------------------------------------
    vmem_cap, num_cores = _chip_info()
    vmem_limit = int(vmem_cap * 0.75)
    fit_budget = max(vmem_limit - 4 * _MIB, 8 * _MIB)   # headroom for Mosaic internal scratch

    x_itemsize = jnp.dtype(x.dtype).itemsize
    w_itemsize = w_dtype.itemsize
    sublane = 8 if x_itemsize >= 4 else 16

    if tile_m is None:
        # 512 on 128-MiB VMEM chips (v5e/v6e), 256 starting point on 64-MiB chips (v7x).
        tile_m = 256 if vmem_cap <= 64 * _MIB else 512
    tile_m = max(sublane, _round_up(int(tile_m), sublane))
    tile_m = min(tile_m, _round_up(rows, sublane))          # never bigger than the whole problem
    if num_cores >= 2:
        # Multi-TensorCore chip (v7x): keep at least one tile per core for megacore balance.
        tile_m = min(tile_m, _round_up(max(_cdiv(rows, num_cores), sublane), sublane))
    tile_m = _fit_tile_m(tile_m, d_model, d_ff, d_ff_chunk,
                         x_itemsize, w_itemsize, fit_budget, sublane)
    # Note: d_model=128 half-fills the 256-wide MXU on v6e/v7x; the large tile_m keeps the
    # systolic array busy over a long M stream (model-shape constraint, nothing to fix here).

    return _ffn_impl(x, w1, b1, w2, b2, gamma, beta,
                     tile_m=int(tile_m), d_ff_chunk=int(d_ff_chunk),
                     use_tanh_gelu=bool(use_tanh_gelu),
                     low_precision=bool(low_precision),
                     cast_weights_bf16=bool(cast_weights_bf16),
                     vmem_limit=int(vmem_limit))


def init_params(key, d_model, d_ff, dtype=jnp.float32):
    """nn.Linear default init (uniform(-1/sqrt(fan_in), 1/sqrt(fan_in))); LayerNorm gamma=1, beta=0."""
    k1, k2, k3, k4 = jax.random.split(key, 4)
    lim1 = 1.0 / jnp.sqrt(jnp.array(d_model, dtype=jnp.float32))
    lim2 = 1.0 / jnp.sqrt(jnp.array(d_ff, dtype=jnp.float32))
    w1 = jax.random.uniform(k1, (d_model, d_ff), dtype, -lim1, lim1)
    b1 = jax.random.uniform(k2, (d_ff,), dtype, -lim1, lim1)
    w2 = jax.random.uniform(k3, (d_ff, d_model), dtype, -lim2, lim2)
    b2 = jax.random.uniform(k4, (d_model,), dtype, -lim2, lim2)
    gamma = jnp.ones((d_model,), dtype)
    beta = jnp.zeros((d_model,), dtype)
    return w1, b1, w2, b2, gamma, beta


def _reference(x, w1, b1, w2, b2, gamma, beta, approximate_gelu=False):
    """Pure-JAX reference of the PyTorch module forward (eval mode), f32 matmuls."""
    hi = jax.lax.Precision.HIGHEST

    def band(xb):
        h = jnp.dot(xb, w1, precision=hi) + b1
        h = jax.nn.gelu(h, approximate=approximate_gelu)
        y = jnp.dot(h, w2, precision=hi) + b2
        y = y + xb
        mean = jnp.mean(y, axis=-1, keepdims=True)
        var = jnp.mean((y - mean) ** 2, axis=-1, keepdims=True)
        return (y - mean) / jnp.sqrt(var + 1e-5) * gamma + beta

    # per-band loop with shared weights == apply to everything
    return jax.vmap(band, in_axes=1, out_axes=1)(x)


if __name__ == "__main__":
    key = jax.random.PRNGKey(0)
    kx, kp = jax.random.split(key)

    # d_model=128 keeps every load/store and the MXU K dim lane-dense (no masked vst).
    batch, bands, nodes, d_model = 2, 4, 16, 128
    d_ff = 4 * d_model  # 512

    x = jax.random.normal(kx, (batch, bands, nodes, d_model), jnp.float32)
    w1, b1, w2, b2, gamma, beta = init_params(kp, d_model, d_ff)

    # 1) f32 parity path (exact-erf GELU, auto-selected for f32) vs. the PyTorch-equivalent reference.
    out = feed_forward_network(x, w1, b1, w2, b2, gamma, beta)
    out = jax.block_until_ready(out)
    ref = _reference(x, w1, b1, w2, b2, gamma, beta, approximate_gelu=False)
    assert out.shape == x.shape
    assert jnp.allclose(out, ref, atol=1e-4, rtol=1e-4), "f32 mismatch vs reference"

    # 2) f32 with an explicit d_ff inner split (exercises the chunked accumulation path).
    out_c = feed_forward_network(x, w1, b1, w2, b2, gamma, beta, d_ff_chunk=256)
    out_c = jax.block_until_ready(out_c)
    assert jnp.allclose(out_c, ref, atol=1e-4, rtol=1e-4), "chunked f32 mismatch vs reference"

    # 3) bf16 workload: tanh-GELU (EUP) + bf16 GELU/MXU operands, f32 accumulation (loose tolerance).
    xb = x.astype(jnp.bfloat16)
    pb = [p.astype(jnp.bfloat16) for p in (w1, b1, w2, b2, gamma, beta)]
    out_b = feed_forward_network(xb, *pb)
    out_b = jax.block_until_ready(out_b)
    ref_b = _reference(xb.astype(jnp.float32),
                       *[p.astype(jnp.float32) for p in pb], approximate_gelu=True)
    assert jnp.allclose(out_b.astype(jnp.float32), ref_b, atol=8e-2, rtol=8e-2), \
        "bf16 mismatch vs reference"

    print("KERNEL_OK")
</pallas_src>

<mosaic_0001>
module attributes {stable_mosaic.version = 11 : i64} {
  func.func @_ffn_kernel(%arg0: i32, %arg1: memref<128x128xf32, #tpu.memory_space<vmem>>, %arg2: memref<128x512xf32, #tpu.memory_space<vmem>>, %arg3: memref<1x512xf32, #tpu.memory_space<vmem>>, %arg4: memref<512x128xf32, #tpu.memory_space<vmem>>, %arg5: memref<1x128xf32, #tpu.memory_space<vmem>>, %arg6: memref<1x128xf32, #tpu.memory_space<vmem>>, %arg7: memref<1x128xf32, #tpu.memory_space<vmem>>, %arg8: memref<128x128xf32, #tpu.memory_space<vmem>>) attributes {dimension_semantics = [#tpu.dimension_semantics<parallel>], iteration_bounds = array<i64: 1>, scalar_prefetch = 0 : i64, scratch_operands = 0 : i64, tpu.core_type = #tpu.core_type<tc>, window_params = [{transform_indices = @transform_0, window_bounds = array<i64: 128, 128>}, {pipeline_mode = #tpu.pipeline_mode<synchronous>, transform_indices = @transform_1, window_bounds = array<i64: 128, 512>}, {pipeline_mode = #tpu.pipeline_mode<synchronous>, transform_indices = @transform_2, window_bounds = array<i64: 1, 512>}, {pipeline_mode = #tpu.pipeline_mode<synchronous>, transform_indices = @transform_3, window_bounds = array<i64: 512, 128>}, {pipeline_mode = #tpu.pipeline_mode<synchronous>, transform_indices = @transform_4, window_bounds = array<i64: 1, 128>}, {pipeline_mode = #tpu.pipeline_mode<synchronous>, transform_indices = @transform_5, window_bounds = array<i64: 1, 128>}, {pipeline_mode = #tpu.pipeline_mode<synchronous>, transform_indices = @transform_6, window_bounds = array<i64: 1, 128>}, {transform_indices = @transform_7, window_bounds = array<i64: 128, 128>}]} {
    %c0 = arith.constant 0 : index
    %c0_0 = arith.constant 0 : index
    %0 = vector.load %arg1[%c0, %c0_0] : memref<128x128xf32, #tpu.memory_space<vmem>>, vector<128x128xf32>
    %cst = arith.constant 0.000000e+00 : f32
    %1 = vector.broadcast %cst : f32 to vector<128x128xf32>
    %c0_1 = arith.constant 0 : index
    %c0_2 = arith.constant 0 : index
    %2 = vector.load %arg2[%c0_1, %c0_2] : memref<128x512xf32, #tpu.memory_space<vmem>>, vector<128x512xf32>
    %cst_3 = arith.constant dense<0.000000e+00> : vector<128x512xf32>
    %3 = tpu.matmul %0, %2, %cst_3 {dimension_numbers = #tpu.dot_dimension_numbers<[1], [0], [0], [1], [0, 0, 1, 1], [], []>} : vector<128x128xf32>, vector<128x512xf32>, vector<128x512xf32> -> vector<128x512xf32>
    %c0_4 = arith.constant 0 : index
    %c0_5 = arith.constant 0 : index
    %4 = vector.load %arg3[%c0_4, %c0_5] : memref<1x512xf32, #tpu.memory_space<vmem>>, vector<1x512xf32>
    %5 = vector.broadcast %4 : vector<1x512xf32> to vector<128x512xf32>
    %6 = arith.addf %3, %5 : vector<128x512xf32>
    %cst_6 = arith.constant 5.000000e-01 : f32
    %7 = vector.broadcast %cst_6 : f32 to vector<128x512xf32>
    %8 = arith.mulf %7, %6 : vector<128x512xf32>
    %cst_7 = arith.constant 0.707106769 : f32
    %9 = vector.broadcast %cst_7 : f32 to vector<128x512xf32>
    %10 = arith.mulf %6, %9 : vector<128x512xf32>
    %11 = math.erf %10 : vector<128x512xf32>
    %cst_8 = arith.constant 1.000000e+00 : f32
    %12 = vector.broadcast %cst_8 : f32 to vector<128x512xf32>
    %13 = arith.addf %12, %11 : vector<128x512xf32>
    %14 = arith.mulf %8, %13 : vector<128x512xf32>
    %c0_9 = arith.constant 0 : index
    %c0_10 = arith.constant 0 : index
    %15 = vector.load %arg4[%c0_9, %c0_10] : memref<512x128xf32, #tpu.memory_space<vmem>>, vector<512x128xf32>
    %cst_11 = arith.constant dense<0.000000e+00> : vector<128x128xf32>
    %16 = tpu.matmul %14, %15, %cst_11 {dimension_numbers = #tpu.dot_dimension_numbers<[1], [0], [0], [1], [0, 0, 1, 1], [], []>} : vector<128x512xf32>, vector<512x128xf32>, vector<128x128xf32> -> vector<128x128xf32>
    %17 = arith.addf %1, %16 : vector<128x128xf32>
    %c0_12 = arith.constant 0 : index
    %c0_13 = arith.constant 0 : index
    %18 = vector.load %arg5[%c0_12, %c0_13] : memref<1x128xf32, #tpu.memory_space<vmem>>, vector<1x128xf32>
    %19 = vector.broadcast %18 : vector<1x128xf32> to vector<128x128xf32>
    %20 = arith.addf %17, %19 : vector<128x128xf32>
    %21 = arith.addf %20, %0 : vector<128x128xf32>
    %cst_14 = arith.constant dense<0.000000e+00> : vector<128xf32>
    %22 = vector.multi_reduction <add>, %21, %cst_14 [1] : vector<128x128xf32> to vector<128xf32>
    %23 = vector.shape_cast %22 : vector<128xf32> to vector<128x1xf32>
    %cst_15 = arith.constant 7.812500e-03 : f32
    %24 = vector.broadcast %cst_15 : f32 to vector<128x1xf32>
    %25 = arith.mulf %23, %24 : vector<128x1xf32>
    %26 = arith.mulf %21, %21 : vector<128x128xf32>
    %cst_16 = arith.constant dense<0.000000e+00> : vector<128xf32>
    %27 = vector.multi_reduction <add>, %26, %cst_16 [1] : vector<128x128xf32> to vector<128xf32>
    %28 = vector.shape_cast %27 : vector<128xf32> to vector<128x1xf32>
    %cst_17 = arith.constant 7.812500e-03 : f32
    %29 = vector.broadcast %cst_17 : f32 to vector<128x1xf32>
    %30 = arith.mulf %28, %29 : vector<128x1xf32>
    %31 = arith.mulf %25, %25 : vector<128x1xf32>
    %32 = arith.subf %30, %31 : vector<128x1xf32>
    %cst_18 = arith.constant 0.000000e+00 : f32
    %33 = vector.broadcast %cst_18 : f32 to vector<128x1xf32>
    %34 = arith.maximumf %32, %33 : vector<128x1xf32>
    %35 = vector.broadcast %25 : vector<128x1xf32> to vector<128x128xf32>
    %36 = arith.subf %21, %35 : vector<128x128xf32>
    %cst_19 = arith.constant 9.99999974E-6 : f32
    %37 = vector.broadcast %cst_19 : f32 to vector<128x1xf32>
    %38 = arith.addf %34, %37 : vector<128x1xf32>
    %39 = math.rsqrt %38 : vector<128x1xf32>
    %40 = vector.broadcast %39 : vector<128x1xf32> to vector<128x128xf32>
    %41 = arith.mulf %36, %40 : vector<128x128xf32>
    %c0_20 = arith.constant 0 : index
    %c0_21 = arith.constant 0 : index
    %42 = vector.load %arg6[%c0_20, %c0_21] : memref<1x128xf32, #tpu.memory_space<vmem>>, vector<1x128xf32>
    %43 = vector.broadcast %42 : vector<1x128xf32> to vector<128x128xf32>
    %44 = arith.mulf %41, %43 : vector<128x128xf32>
    %c0_22 = arith.constant 0 : index
    %c0_23 = arith.constant 0 : index
    %45 = vector.load %arg7[%c0_22, %c0_23] : memref<1x128xf32, #tpu.memory_space<vmem>>, vector<1x128xf32>
    %46 = vector.broadcast %45 : vector<1x128xf32> to vector<128x128xf32>
    %47 = arith.addf %44, %46 : vector<128x128xf32>
    %c0_24 = arith.constant 0 : index
    %c0_25 = arith.constant 0 : index
    %48 = vector.load %arg8[%c0_24, %c0_25] : memref<128x128xf32, #tpu.memory_space<vmem>>, vector<128x128xf32>
    tpu.vector_store %arg8[%c0_24, %c0_25], %47 {strides = array<i32>} : memref<128x128xf32, #tpu.memory_space<vmem>>, vector<128x128xf32>,
    return
  }
  func.func @transform_0(%arg0: i32) -> (i32, i32) {
    %c0_i32 = arith.constant 0 : i32
    %c0_i32_0 = arith.constant 0 : i32
    return %arg0, %c0_i32 : i32, i32
  }
  func.func @transform_1(%arg0: i32) -> (i32, i32) {
    %c0_i32 = arith.constant 0 : i32
    %c0_i32_0 = arith.constant 0 : i32
    %c0_i32_1 = arith.constant 0 : i32
    return %c0_i32, %c0_i32_0 : i32, i32
  }
  func.func @transform_2(%arg0: i32) -> (i32, i32) {
    %c0_i32 = arith.constant 0 : i32
    %c0_i32_0 = arith.constant 0 : i32
    %c0_i32_1 = arith.constant 0 : i32
    return %c0_i32, %c0_i32_0 : i32, i32
  }
  func.func @transform_3(%arg0: i32) -> (i32, i32) {
    %c0_i32 = arith.constant 0 : i32
    %c0_i32_0 = arith.constant 0 : i32
    %c0_i32_1 = arith.constant 0 : i32
    return %c0_i32, %c0_i32_0 : i32, i32
  }
  func.func @transform_4(%arg0: i32) -> (i32, i32) {
    %c0_i32 = arith.constant 0 : i32
    %c0_i32_0 = arith.constant 0 : i32
    %c0_i32_1 = arith.constant 0 : i32
    return %c0_i32, %c0_i32_0 : i32, i32
  }
  func.func @transform_5(%arg0: i32) -> (i32, i32) {
    %c0_i32 = arith.constant 0 : i32
    %c0_i32_0 = arith.constant 0 : i32
    %c0_i32_1 = arith.constant 0 : i32
    return %c0_i32, %c0_i32_0 : i32, i32
  }
  func.func @transform_6(%arg0: i32) -> (i32, i32) {
    %c0_i32 = arith.constant 0 : i32
    %c0_i32_0 = arith.constant 0 : i32
    %c0_i32_1 = arith.constant 0 : i32
    return %c0_i32, %c0_i32_0 : i32, i32
  }
  func.func @transform_7(%arg0: i32) -> (i32, i32) {
    %c0_i32 = arith.constant 0 : i32
    %c0_i32_0 = arith.constant 0 : i32
    return %arg0, %c0_i32 : i32, i32
  }
}

</mosaic_0001>

<llo_original>
// kernel: _ffn_impl.1
$region0: #{_ffn_impl.1}
  #allocation0 [shape = 'u32[]', space=smem, size = 0x4, offset = 0x4, fixed_abs, tag = 'smem constant byte address 0x4 - core index']
  #allocation1 [shape = 'u32[144,128]{1,0:T(1,128)}', space=vmem, size = 0x12000, scoped, tag = 'internal scratch']
  %s0 = inlined_call_operand.hbm [shape: f32[128,128], index: 0, kind: input, shape index: {}]
  %s1 = inlined_call_operand.hbm [shape: f32[128,512], index: 1, kind: input, shape index: {}]
  %s2 = inlined_call_operand.hbm [shape: f32[1,512], index: 2, kind: input, shape index: {}]
  %s3 = inlined_call_operand.hbm [shape: f32[512,128], index: 3, kind: input, shape index: {}]
  %s4 = inlined_call_operand.hbm [shape: f32[1,128], index: 4, kind: input, shape index: {}]
  %s5 = inlined_call_operand.hbm [shape: f32[1,128], index: 5, kind: input, shape index: {}]
  %s6 = inlined_call_operand.hbm [shape: f32[1,128], index: 6, kind: input, shape index: {}]
  %s7 = inlined_call_operand.hbm [shape: f32[128,128], index: 7, kind: output, shape index: {}]
  %s8 = sld [smem:[#allocation0]]
  $region66: #{_ffn_impl.1} parent=0
    _
  %s10 = ssub.s32 1, %s8
  %s11 = scalar_select 0, %s10, %s8
  $region1: #{_ffn_impl.1} parent=0
    #allocation2 [shape = 'u8[65536]{0}', space=vmem, size = 0x10000, scoped, tag = 'input window, operand 0, single buffered']
    #allocation3 [shape = 's32[1]{0}', space=sflag, size = 0x4, scoped, tag = 'scoped memory for _ffn_impl.1']
    #allocation4 [shape = 's32[1]{0}', space=sflag, size = 0x4, scoped, tag = 'scoped memory for _ffn_impl.1']
    #allocation5 [shape = 'u8[262144]{0}', space=vmem, size = 0x40000, scoped, tag = 'input window, operand 1, single buffered']
    #allocation6 [shape = 's32[1]{0}', space=sflag, size = 0x4, scoped, tag = 'scoped memory for _ffn_impl.1']
    #allocation7 [shape = 'u8[2048]{0}', space=vmem, size = 0x800, scoped, tag = 'input window, operand 2, single buffered']
    #allocation8 [shape = 'u8[262144]{0}', space=vmem, size = 0x40000, scoped, tag = 'input window, operand 3, single buffered']
    #allocation9 [shape = 's32[1]{0}', space=sflag, size = 0x4, scoped, tag = 'scoped memory for _ffn_impl.1']
    #allocation10 [shape = 'u8[512]{0}', space=vmem, size = 0x400, scoped, tag = 'input window, operand 4, single buffered']
    #allocation11 [shape = 'u8[512]{0}', space=vmem, size = 0x400, scoped, tag = 'input window, operand 5, single buffered']
    #allocation12 [shape = 's32[1]{0}', space=sflag, size = 0x4, scoped, tag = 'scoped memory for _ffn_impl.1']
    #allocation13 [shape = 'u8[512]{0}', space=vmem, size = 0x400, scoped, tag = 'input window, operand 6, single buffered']
    #allocation14 [shape = 'u8[65536]{0}', space=vmem, size = 0x10000, scoped, tag = 'output window, operand 0, single buffered']
    %12 = vsyncpa [#allocation3], 0
    %13 = vsyncpa [#allocation6], 0
    %14 = vsyncpa [#allocation9], 0
    %15 = vsyncpa [#allocation12], 0
    %16 = vsyncpa [#allocation4], 0
    // Predicated region
    $region2: #{_ffn_impl.1} parent=1 // pred_check
      _
    $region3: #{_ffn_impl.1} parent=1 // pred_check_branch
      %18 = sbr.rel (0) target = $region5
    $region4: #{_ffn_impl.1} parent=1 // pred_region
      %s20 = ssub.s32 2048, 2048
      %21 = vsyncadd [#allocation3], %s20
      %s22 = sshll.u32 [#allocation2], 4
      %s23 = int_to_ptr.vmem [resolvable:$true] %s22
      %28 = dma.hbm_to_vmem [thread:$0]  %s0, 2048, %s23, [#allocation3], 128, 128, 8
    $region5: #{_ffn_impl.1} parent=1 // pred_fallthru
      _
    // Predicated region
    $region6: #{_ffn_impl.1} parent=1 // pred_check
      _
    $region7: #{_ffn_impl.1} parent=1 // pred_check_branch
      %30 = sbr.rel (0) target = $region9
    $region8: #{_ffn_impl.1} parent=1 // pred_region
      %s32 = ssub.s32 8192, 8192
      %33 = vsyncadd [#allocation6], %s32
      %s34 = sshll.u32 [#allocation5], 4
      %s35 = int_to_ptr.vmem [resolvable:$true] %s34
      %40 = dma.hbm_to_vmem [thread:$0]  %s1, 8192, %s35, [#allocation6], 512, 512, 32
    $region9: #{_ffn_impl.1} parent=1 // pred_fallthru
      _
    // Predicated region
    $region10: #{_ffn_impl.1} parent=1 // pred_check
      _
    $region11: #{_ffn_impl.1} parent=1 // pred_check_branch
      %42 = sbr.rel (0) target = $region13
    $region12: #{_ffn_impl.1} parent=1 // pred_region
      %s44 = ssub.s32 64, 64
      %45 = vsyncadd [#allocation6], %s44
      %s47 = sshll.u32 [#allocation7], 4
      %s48 = int_to_ptr.vmem [resolvable:$true] %s47
      %50 = dma.hbm_to_vmem [thread:$0]  %s2, 64, %s48, [#allocation6]
    $region13: #{_ffn_impl.1} parent=1 // pred_fallthru
      _
    // Predicated region
    $region14: #{_ffn_impl.1} parent=1 // pred_check
      _
    $region15: #{_ffn_impl.1} parent=1 // pred_check_branch
      %52 = sbr.rel (0) target = $region17
    $region16: #{_ffn_impl.1} parent=1 // pred_region
      %s54 = ssub.s32 8192, 8192
      %55 = vsyncadd [#allocation9], %s54
      %s56 = sshll.u32 [#allocation8], 4
      %s57 = int_to_ptr.vmem [resolvable:$true] %s56
      %62 = dma.hbm_to_vmem [thread:$0]  %s3, 8192, %s57, [#allocation9], 128, 128, 8
    $region17: #{_ffn_impl.1} parent=1 // pred_fallthru
      _
    // Predicated region
    $region18: #{_ffn_impl.1} parent=1 // pred_check
      _
    $region19: #{_ffn_impl.1} parent=1 // pred_check_branch
      %64 = sbr.rel (0) target = $region21
    $region20: #{_ffn_impl.1} parent=1 // pred_region
      %s66 = ssub.s32 16, 16
      %67 = vsyncadd [#allocation9], %s66
      %s69 = sshll.u32 [#allocation10], 4
      %s70 = int_to_ptr.vmem [resolvable:$true] %s69
      %72 = dma.hbm_to_vmem [thread:$0]  %s4, 16, %s70, [#allocation9]
    $region21: #{_ffn_impl.1} parent=1 // pred_fallthru
      _
    // Predicated region
    $region22: #{_ffn_impl.1} parent=1 // pred_check
      _
    $region23: #{_ffn_impl.1} parent=1 // pred_check_branch
      %74 = sbr.rel (0) target = $region25
    $region24: #{_ffn_impl.1} parent=1 // pred_region
      %s76 = ssub.s32 16, 16
      %77 = vsyncadd [#allocation12], %s76
      %s79 = sshll.u32 [#allocation11], 4
      %s80 = int_to_ptr.vmem [resolvable:$true] %s79
      %82 = dma.hbm_to_vmem [thread:$0]  %s5, 16, %s80, [#allocation12]
    $region25: #{_ffn_impl.1} parent=1 // pred_fallthru
      _
    // Predicated region
    $region26: #{_ffn_impl.1} parent=1 // pred_check
      _
    $region27: #{_ffn_impl.1} parent=1 // pred_check_branch
      %84 = sbr.rel (0) target = $region29
    $region28: #{_ffn_impl.1} parent=1 // pred_region
      %s86 = ssub.s32 16, 16
      %87 = vsyncadd [#allocation12], %s86
      %s89 = sshll.u32 [#allocation13], 4
      %s90 = int_to_ptr.vmem [resolvable:$true] %s89
      %92 = dma.hbm_to_vmem [thread:$0]  %s6, 16, %s90, [#allocation12]
    $region29: #{_ffn_impl.1} parent=1 // pred_fallthru
      _
    // Predicated region
    $region30: #{_ffn_impl.1} parent=1 // pred_check
      _
    $region31: #{_ffn_impl.1} parent=1 // pred_check_branch
      %94 = sbr.rel (0) target = $region33
    $region32: #{_ffn_impl.1} parent=1 // pred_region
      %95 = dma.done [#allocation3], 2048
    $region33: #{_ffn_impl.1} parent=1 // pred_fallthru
      _
    // Predicated region
    $region34: #{_ffn_impl.1} parent=1 // pred_check
      _
    $region35: #{_ffn_impl.1} parent=1 // pred_check_branch
      %97 = sbr.rel (0) target = $region37
    $region36: #{_ffn_impl.1} parent=1 // pred_region
      %98 = dma.done [#allocation6], 8192
    $region37: #{_ffn_impl.1} parent=1 // pred_fallthru
      _
    // Predicated region
    $region38: #{_ffn_impl.1} parent=1 // pred_check
      _
    $region39: #{_ffn_impl.1} parent=1 // pred_check_branch
      %100 = sbr.rel (0) target = $region41
    $region40: #{_ffn_impl.1} parent=1 // pred_region
      %101 = dma.done [#allocation6], 64
    $region41: #{_ffn_impl.1} parent=1 // pred_fallthru
      _
    // Predicated region
    $region42: #{_ffn_impl.1} parent=1 // pred_check
      _
    $region43: #{_ffn_impl.1} parent=1 // pred_check_branch
      %103 = sbr.rel (0) target = $region45
    $region44: #{_ffn_impl.1} parent=1 // pred_region
      %104 = dma.done [#allocation9], 8192
    $region45: #{_ffn_impl.1} parent=1 // pred_fallthru
      _
    // Predicated region
    $region46: #{_ffn_impl.1} parent=1 // pred_check
      _
    $region47: #{_ffn_impl.1} parent=1 // pred_check_branch
      %106 = sbr.rel (0) target = $region49
    $region48: #{_ffn_impl.1} parent=1 // pred_region
      %107 = dma.done [#allocation9], 16
    $region49: #{_ffn_impl.1} parent=1 // pred_fallthru
      _
    // Predicated region
    $region50: #{_ffn_impl.1} parent=1 // pred_check
      _
    $region51: #{_ffn_impl.1} parent=1 // pred_check_branch
      %109 = sbr.rel (0) target = $region53
    $region52: #{_ffn_impl.1} parent=1 // pred_region
      %110 = dma.done [#allocation12], 16
    $region53: #{_ffn_impl.1} parent=1 // pred_fallthru
      _
    // Predicated region
    $region54: #{_ffn_impl.1} parent=1 // pred_check
      _
    $region55: #{_ffn_impl.1} parent=1 // pred_check_branch
      %112 = sbr.rel (0) target = $region57
    $region56: #{_ffn_impl.1} parent=1 // pred_region
      %113 = dma.done [#allocation12], 16
    $region57: #{_ffn_impl.1} parent=1 // pred_fallthru
      _
    %v114 = vld [vmem:[#allocation2] sm:$0xff]
    %v115 = vld [vmem:[#allocation2 + $0x8] sm:$0xff]
    %v116 = vld [vmem:[#allocation2 + $0x10] sm:$0xff]
    %v117 = vld [vmem:[#allocation2 + $0x18] sm:$0xff]
    %v118 = vld [vmem:[#allocation2 + $0x20] sm:$0xff]
    %v119 = vld [vmem:[#allocation2 + $0x28] sm:$0xff]
    %v120 = vld [vmem:[#allocation2 + $0x30] sm:$0xff]
    %v121 = vld [vmem:[#allocation2 + $0x38] sm:$0xff]
    %v122 = vld [vmem:[#allocation2 + $0x40] sm:$0xff]
    %v123 = vld [vmem:[#allocation2 + $0x48] sm:$0xff]
    %v124 = vld [vmem:[#allocation2 + $0x50] sm:$0xff]
    %v125 = vld [vmem:[#allocation2 + $0x58] sm:$0xff]
    %v126 = vld [vmem:[#allocation2 + $0x60] sm:$0xff]
    %v127 = vld [vmem:[#allocation2 + $0x68] sm:$0xff]
    %v128 = vld [vmem:[#allocation2 + $0x70] sm:$0xff]
    %v129 = vld [vmem:[#allocation2 + $0x78] sm:$0xff]
    %v130 = vld [vmem:[#allocation5] sm:$0xff]
    %v131 = vld [vmem:[#allocation5 + $0x8] sm:$0xff]
    %v132 = vld [vmem:[#allocation5 + $0x10] sm:$0xff]
    %v133 = vld [vmem:[#allocation5 + $0x18] sm:$0xff]
    %v134 = vld [vmem:[#allocation5 + $0x20] sm:$0xff]
    %v135 = vld [vmem:[#allocation5 + $0x28] sm:$0xff]
    %v136 = vld [vmem:[#allocation5 + $0x30] sm:$0xff]
    %v137 = vld [vmem:[#allocation5 + $0x38] sm:$0xff]
    %v138 = vld [vmem:[#allocation5 + $0x40] sm:$0xff]
    %v139 = vld [vmem:[#allocation5 + $0x48] sm:$0xff]
    %v140 = vld [vmem:[#allocation5 + $0x50] sm:$0xff]
    %v141 = vld [vmem:[#allocation5 + $0x58] sm:$0xff]
    %v142 = vld [vmem:[#allocation5 + $0x60] sm:$0xff]
    %v143 = vld [vmem:[#allocation5 + $0x68] sm:$0xff]
    %v144 = vld [vmem:[#allocation5 + $0x70] sm:$0xff]
    %v145 = vld [vmem:[#allocation5 + $0x78] sm:$0xff]
    %v146 = vld [vmem:[#allocation5 + $0x80] sm:$0xff]
    %v147 = vld [vmem:[#allocation5 + $0x88] sm:$0xff]
    %v148 = vld [vmem:[#allocation5 + $0x90] sm:$0xff]
    %v149 = vld [vmem:[#allocation5 + $0x98] sm:$0xff]
    %v150 = vld [vmem:[#allocation5 + $0xa0] sm:$0xff]
    %v151 = vld [vmem:[#allocation5 + $0xa8] sm:$0xff]
    %v152 = vld [vmem:[#allocation5 + $0xb0] sm:$0xff]
    %v153 = vld [vmem:[#allocation5 + $0xb8] sm:$0xff]
    %v154 = vld [vmem:[#allocation5 + $0xc0] sm:$0xff]
    %v155 = vld [vmem:[#allocation5 + $0xc8] sm:$0xff]
    %v156 = vld [vmem:[#allocation5 + $0xd0] sm:$0xff]
    %v157 = vld [vmem:[#allocation5 + $0xd8] sm:$0xff]
    %v158 = vld [vmem:[#allocation5 + $0xe0] sm:$0xff]
    %v159 = vld [vmem:[#allocation5 + $0xe8] sm:$0xff]
    %v160 = vld [vmem:[#allocation5 + $0xf0] sm:$0xff]
    %v161 = vld [vmem:[#allocation5 + $0xf8] sm:$0xff]
    %v162 = vld [vmem:[#allocation5 + $0x100] sm:$0xff]
    %v163 = vld [vmem:[#allocation5 + $0x108] sm:$0xff]
    %v164 = vld [vmem:[#allocation5 + $0x110] sm:$0xff]
    %v165 = vld [vmem:[#allocation5 + $0x118] sm:$0xff]
    %v166 = vld [vmem:[#allocation5 + $0x120] sm:$0xff]
    %v167 = vld [vmem:[#allocation5 + $0x128] sm:$0xff]
    %v168 = vld [vmem:[#allocation5 + $0x130] sm:$0xff]
    %v169 = vld [vmem:[#allocation5 + $0x138] sm:$0xff]
    %v170 = vld [vmem:[#allocation5 + $0x140] sm:$0xff]
    %v171 = vld [vmem:[#allocation5 + $0x148] sm:$0xff]
    %v172 = vld [vmem:[#allocation5 + $0x150] sm:$0xff]
    %v173 = vld [vmem:[#allocation5 + $0x158] sm:$0xff]
    %v174 = vld [vmem:[#allocation5 + $0x160] sm:$0xff]
    %v175 = vld [vmem:[#allocation5 + $0x168] sm:$0xff]
    %v176 = vld [vmem:[#allocation5 + $0x170] sm:$0xff]
    %v177 = vld [vmem:[#allocation5 + $0x178] sm:$0xff]
    %v178 = vld [vmem:[#allocation5 + $0x180] sm:$0xff]
    %v179 = vld [vmem:[#allocation5 + $0x188] sm:$0xff]
    %v180 = vld [vmem:[#allocation5 + $0x190] sm:$0xff]
    %v181 = vld [vmem:[#allocation5 + $0x198] sm:$0xff]
    %v182 = vld [vmem:[#allocation5 + $0x1a0] sm:$0xff]
    %v183 = vld [vmem:[#allocation5 + $0x1a8] sm:$0xff]
    %v184 = vld [vmem:[#allocation5 + $0x1b0] sm:$0xff]
    %v185 = vld [vmem:[#allocation5 + $0x1b8] sm:$0xff]
    %v186 = vld [vmem:[#allocation5 + $0x1c0] sm:$0xff]
    %v187 = vld [vmem:[#allocation5 + $0x1c8] sm:$0xff]
    %v188 = vld [vmem:[#allocation5 + $0x1d0] sm:$0xff]
    %v189 = vld [vmem:[#allocation5 + $0x1d8] sm:$0xff]
    %v190 = vld [vmem:[#allocation5 + $0x1e0] sm:$0xff]
    %v191 = vld [vmem:[#allocation5 + $0x1e8] sm:$0xff]
    %v192 = vld [vmem:[#allocation5 + $0x1f0] sm:$0xff]
    %v193 = vld [vmem:[#allocation5 + $0x1f8] sm:$0xff]
    %v194 = vld [vmem:[#allocation7] sm:$0xf]
    %v196 = vlaneseq
    %v197 = vshrl.u32 %v196, 7
    %v198 = vsub.s32 0, %v197
    %v199 = vrot.slane %v194, %v198
    %v200 = vlaneseq
    %v201 = vshrl.u32 %v200, 7
    %v202 = vsub.s32 1, %v201
    %v203 = vrot.slane %v194, %v202
    %v204 = vlaneseq
    %v205 = vshrl.u32 %v204, 7
    %v206 = vsub.s32 2, %v205
    %v207 = vrot.slane %v194, %v206
    %v208 = vlaneseq
    %v209 = vshrl.u32 %v208, 7
    %v210 = vsub.s32 3, %v209
    %v211 = vrot.slane %v194, %v210
    %216 = vmatprep.subr.mxu0 %v131
    %217 = vmatpush1.msra.mxu0 %v130
    %218 = vmatprep.subr.mxu0 %v135
    %219 = vmatpush1.msra.mxu0 %v134
    %220 = vmatprep.subr.mxu0 %v139
    %221 = vmatpush1.msra.mxu0 %v138
    %222 = vmatprep.subr.mxu0 %v143
    %223 = vmatpush1.msra.mxu0 %v142
    %224 = vmatprep.subr.mxu0 %v147
    %225 = vmatpush1.msra.mxu0 %v146
    %226 = vmatprep.subr.mxu0 %v151
    %227 = vmatpush1.msra.mxu0 %v150
    %228 = vmatprep.subr.mxu0 %v155
    %229 = vmatpush1.msra.mxu0 %v154
    %230 = vmatprep.subr.mxu0 %v159
    %231 = vmatpush1.msra.mxu0 %v158
    %232 = vmatprep.subr.mxu0 %v163
    %233 = vmatpush1.msra.mxu0 %v162
    %234 = vmatprep.subr.mxu0 %v167
    %235 = vmatpush1.msra.mxu0 %v166
    %236 = vmatprep.subr.mxu0 %v171
    %237 = vmatpush1.msra.mxu0 %v170
    %238 = vmatprep.subr.mxu0 %v175
    %239 = vmatpush1.msra.mxu0 %v174
    %240 = vmatprep.subr.mxu0 %v179
    %241 = vmatpush1.msra.mxu0 %v178
    %242 = vmatprep.subr.mxu0 %v183
    %243 = vmatpush1.msra.mxu0 %v182
    %244 = vmatprep.subr.mxu0 %v187
    %245 = vmatpush1.msra.mxu0 %v186
    %246 = vmatprep.subr.mxu0 %v191
    %247 = vmatpush1.msra.mxu0 %v190
    %248 = vmatprep.subr.mxu0 0.0
    %249 = vmatpush1.msra.mxu0 0.0
    %250 = vmatprep.subr.mxu0 0.0
    %251 = vmatpush1.msra.mxu0 0.0
    %252 = vmatprep.subr.mxu0 0.0
    %253 = vmatpush1.msra.mxu0 0.0
    %254 = vmatprep.subr.mxu0 0.0
    %255 = vmatpush1.msra.mxu0 0.0
    %256 = vmatprep.subr.mxu0 0.0
    %257 = vmatpush1.msra.mxu0 0.0
    %258 = vmatprep.subr.mxu0 0.0
    %259 = vmatpush1.msra.mxu0 0.0
    %260 = vmatprep.subr.mxu0 0.0
    %261 = vmatpush1.msra.mxu0 0.0
    %262 = vmatprep.subr.mxu0 0.0
    %263 = vmatpush1.msra.mxu0 0.0
    %264 = vmatprep.subr.mxu0 0.0
    %265 = vmatpush1.msra.mxu0 0.0
    %266 = vmatprep.subr.mxu0 0.0
    %267 = vmatpush1.msra.mxu0 0.0
    %268 = vmatprep.subr.mxu0 0.0
    %269 = vmatpush1.msra.mxu0 0.0
    %270 = vmatprep.subr.mxu0 0.0
    %271 = vmatpush1.msra.mxu0 0.0
    %272 = vmatprep.subr.mxu0 0.0
    %273 = vmatpush1.msra.mxu0 0.0
    %274 = vmatprep.subr.mxu0 0.0
    %275 = vmatpush1.msra.mxu0 0.0
    %276 = vmatprep.subr.mxu0 0.0
    %277 = vmatpush1.msra.mxu0 0.0
    %278 = vmatprep.subr.mxu0 0.0
    %279 = vmatpush1.msra.mxu0 0.0
    %280 = vmatprep.mubr.f32.mxu0 0.0
    %281 = vmatmul.mubr.f32.gmra.mrb[0].mxu0 %v114
    %v282 = vpop.f32.mrb[0].mxu0
    %v283 = vadd.f32 %v199, %v282
    %v284 = vpop.f32.mrb[0].mxu0
    %v285 = vadd.f32 %v203, %v284
    %286 = vmatprep.mubr.f32.mxu0 0.0
    %287 = vmatmul.mubr.f32.gmra.mrb[0].mxu0 %v115
    %v288 = vpop.f32.mrb[0].mxu0
    %v289 = vadd.f32 %v199, %v288
    %v290 = vpop.f32.mrb[0].mxu0
    %v291 = vadd.f32 %v203, %v290
    %292 = vmatprep.mubr.f32.mxu0 0.0
    %293 = vmatmul.mubr.f32.gmra.mrb[0].mxu0 %v116
    %v294 = vpop.f32.mrb[0].mxu0
    %v295 = vadd.f32 %v199, %v294
    %v296 = vpop.f32.mrb[0].mxu0
    %v297 = vadd.f32 %v203, %v296
    %298 = vmatprep.mubr.f32.mxu0 0.0
    %299 = vmatmul.mubr.f32.gmra.mrb[0].mxu0 %v117
    %v300 = vpop.f32.mrb[0].mxu0
    %v301 = vadd.f32 %v199, %v300
    %v302 = vpop.f32.mrb[0].mxu0
    %v303 = vadd.f32 %v203, %v302
    %304 = vmatprep.mubr.f32.mxu0 0.0
    %305 = vmatmul.mubr.f32.gmra.mrb[0].mxu0 %v118
    %v306 = vpop.f32.mrb[0].mxu0
    %v307 = vadd.f32 %v199, %v306
    %v308 = vpop.f32.mrb[0].mxu0
    %v309 = vadd.f32 %v203, %v308
    %310 = vmatprep.mubr.f32.mxu0 0.0
    %311 = vmatmul.mubr.f32.gmra.mrb[0].mxu0 %v119
    %v312 = vpop.f32.mrb[0].mxu0
    %v313 = vadd.f32 %v199, %v312
    %v314 = vpop.f32.mrb[0].mxu0
    %v315 = vadd.f32 %v203, %v314
    %316 = vmatprep.mubr.f32.mxu0 0.0
    %317 = vmatmul.mubr.f32.gmra.mrb[0].mxu0 %v120
    %v318 = vpop.f32.mrb[0].mxu0
    %v319 = vadd.f32 %v199, %v318
    %v320 = vpop.f32.mrb[0].mxu0
    %v321 = vadd.f32 %v203, %v320
    %322 = vmatprep.mubr.f32.mxu0 0.0
    %323 = vmatmul.mubr.f32.gmra.mrb[0].mxu0 %v121
    %v324 = vpop.f32.mrb[0].mxu0
    %v325 = vadd.f32 %v199, %v324
    %v326 = vpop.f32.mrb[0].mxu0
    %v327 = vadd.f32 %v203, %v326
    %328 = vmatprep.mubr.f32.mxu0 0.0
    %329 = vmatmul.mubr.f32.gmra.mrb[0].mxu0 %v122
    %v330 = vpop.f32.mrb[0].mxu0
    %v331 = vadd.f32 %v199, %v330
    %v332 = vpop.f32.mrb[0].mxu0
    %v333 = vadd.f32 %v203, %v332
    %334 = vmatprep.mubr.f32.mxu0 0.0
    %335 = vmatmul.mubr.f32.gmra.mrb[0].mxu0 %v123
    %v336 = vpop.f32.mrb[0].mxu0
    %v337 = vadd.f32 %v199, %v336
    %v338 = vpop.f32.mrb[0].mxu0
    %v339 = vadd.f32 %v203, %v338
    %340 = vmatprep.mubr.f32.mxu0 0.0
    %341 = vmatmul.mubr.f32.gmra.mrb[0].mxu0 %v124
    %v342 = vpop.f32.mrb[0].mxu0
    %v343 = vadd.f32 %v199, %v342
    %v344 = vpop.f32.mrb[0].mxu0
    %v345 = vadd.f32 %v203, %v344
    %346 = vmatprep.mubr.f32.mxu0 0.0
    %347 = vmatmul.mubr.f32.gmra.mrb[0].mxu0 %v125
    %v348 = vpop.f32.mrb[0].mxu0
    %v349 = vadd.f32 %v199, %v348
    %v350 = vpop.f32.mrb[0].mxu0
    %v351 = vadd.f32 %v203, %v350
    %352 = vmatprep.mubr.f32.mxu0 0.0
    %353 = vmatmul.mubr.f32.gmra.mrb[0].mxu0 %v126
    %v354 = vpop.f32.mrb[0].mxu0
    %v355 = vadd.f32 %v199, %v354
    %v356 = vpop.f32.mrb[0].mxu0
    %v357 = vadd.f32 %v203, %v356
    %358 = vmatprep.mubr.f32.mxu0 0.0
    %359 = vmatmul.mubr.f32.gmra.mrb[0].mxu0 %v127
    %v360 = vpop.f32.mrb[0].mxu0
    %v361 = vadd.f32 %v199, %v360
    %v362 = vpop.f32.mrb[0].mxu0
    %v363 = vadd.f32 %v203, %v362
    %364 = vmatprep.mubr.f32.mxu0 0.0
    %365 = vmatmul.mubr.f32.gmra.mrb[0].mxu0 %v128
    %v366 = vpop.f32.mrb[0].mxu0
    %v367 = vadd.f32 %v199, %v366
    %v368 = vpop.f32.mrb[0].mxu0
    %v369 = vadd.f32 %v203, %v368
    %370 = vmatprep.mubr.f32.mxu0 0.0
    %371 = vmatmul.mubr.f32.gmra.mrb[0].mxu0 %v129
    %v372 = vpop.f32.mrb[0].mxu0
    %v373 = vadd.f32 %v199, %v372
    %v374 = vpop.f32.mrb[0].mxu0
    %v375 = vadd.f32 %v203, %v374
    %376 = vdwg.mxu0
    %377 = vmatprep.subr.mxu0 %v133
    %378 = vmatpush1.msra.mxu0 %v132
    %379 = vmatprep.subr.mxu0 %v137
    %380 = vmatpush1.msra.mxu0 %v136
    %381 = vmatprep.subr.mxu0 %v141
    %382 = vmatpush1.msra.mxu0 %v140
    %383 = vmatprep.subr.mxu0 %v145
    %384 = vmatpush1.msra.mxu0 %v144
    %385 = vmatprep.subr.mxu0 %v149
    %386 = vmatpush1.msra.mxu0 %v148
    %387 = vmatprep.subr.mxu0 %v153
    %388 = vmatpush1.msra.mxu0 %v152
    %389 = vmatprep.subr.mxu0 %v157
    %390 = vmatpush1.msra.mxu0 %v156
    %391 = vmatprep.subr.mxu0 %v161
    %392 = vmatpush1.msra.mxu0 %v160
    %393 = vmatprep.subr.mxu0 %v165
    %394 = vmatpush1.msra.mxu0 %v164
    %395 = vmatprep.subr.mxu0 %v169
    %396 = vmatpush1.msra.mxu0 %v168
    %397 = vmatprep.subr.mxu0 %v173
    %398 = vmatpush1.msra.mxu0 %v172
    %399 = vmatprep.subr.mxu0 %v177
    %400 = vmatpush1.msra.mxu0 %v176
    %401 = vmatprep.subr.mxu0 %v181
    %402 = vmatpush1.msra.mxu0 %v180
    %403 = vmatprep.subr.mxu0 %v185
    %404 = vmatpush1.msra.mxu0 %v184
    %405 = vmatprep.subr.mxu0 %v189
    %406 = vmatpush1.msra.mxu0 %v188
    %407 = vmatprep.subr.mxu0 %v193
    %408 = vmatpush1.msra.mxu0 %v192
    %409 = vmatprep.subr.mxu0 0.0
    %410 = vmatpush1.msra.mxu0 0.0
    %411 = vmatprep.subr.mxu0 0.0
    %412 = vmatpush1.msra.mxu0 0.0
    %413 = vmatprep.subr.mxu0 0.0
    %414 = vmatpush1.msra.mxu0 0.0
    %415 = vmatprep.subr.mxu0 0.0
    %416 = vmatpush1.msra.mxu0 0.0
    %417 = vmatprep.subr.mxu0 0.0
    %418 = vmatpush1.msra.mxu0 0.0
    %419 = vmatprep.subr.mxu0 0.0
    %420 = vmatpush1.msra.mxu0 0.0
    %421 = vmatprep.subr.mxu0 0.0
    %422 = vmatpush1.msra.mxu0 0.0
    %423 = vmatprep.subr.mxu0 0.0
    %424 = vmatpush1.msra.mxu0 0.0
    %425 = vmatprep.subr.mxu0 0.0
    %426 = vmatpush1.msra.mxu0 0.0
    %427 = vmatprep.subr.mxu0 0.0
    %428 = vmatpush1.msra.mxu0 0.0
    %429 = vmatprep.subr.mxu0 0.0
    %430 = vmatpush1.msra.mxu0 0.0
    %431 = vmatprep.subr.mxu0 0.0
    %432 = vmatpush1.msra.mxu0 0.0
    %433 = vmatprep.subr.mxu0 0.0
    %434 = vmatpush1.msra.mxu0 0.0
    %435 = vmatprep.subr.mxu0 0.0
    %436 = vmatpush1.msra.mxu0 0.0
    %437 = vmatprep.subr.mxu0 0.0
    %438 = vmatpush1.msra.mxu0 0.0
    %439 = vmatprep.subr.mxu0 0.0
    %440 = vmatpush1.msra.mxu0 0.0
    %441 = vmatprep.mubr.f32.mxu0 0.0
    %442 = vmatmul.mubr.f32.gmra.mrb[0].mxu0 %v114
    %v443 = vpop.f32.mrb[0].mxu0
    %v444 = vadd.f32 %v207, %v443
    %v445 = vpop.f32.mrb[0].mxu0
    %v446 = vadd.f32 %v211, %v445
    %447 = vmatprep.mubr.f32.mxu0 0.0
    %448 = vmatmul.mubr.f32.gmra.mrb[0].mxu0 %v115
    %v449 = vpop.f32.mrb[0].mxu0
    %v450 = vadd.f32 %v207, %v449
    %v451 = vpop.f32.mrb[0].mxu0
    %v452 = vadd.f32 %v211, %v451
    %453 = vmatprep.mubr.f32.mxu0 0.0
    %454 = vmatmul.mubr.f32.gmra.mrb[0].mxu0 %v116
    %v455 = vpop.f32.mrb[0].mxu0
    %v456 = vadd.f32 %v207, %v455
    %v457 = vpop.f32.mrb[0].mxu0
    %v458 = vadd.f32 %v211, %v457
    %459 = vmatprep.mubr.f32.mxu0 0.0
    %460 = vmatmul.mubr.f32.gmra.mrb[0].mxu0 %v117
    %v461 = vpop.f32.mrb[0].mxu0
    %v462 = vadd.f32 %v207, %v461
    %v463 = vpop.f32.mrb[0].mxu0
    %v464 = vadd.f32 %v211, %v463
    %465 = vmatprep.mubr.f32.mxu0 0.0
    %466 = vmatmul.mubr.f32.gmra.mrb[0].mxu0 %v118
    %v467 = vpop.f32.mrb[0].mxu0
    %v468 = vadd.f32 %v207, %v467
    %v469 = vpop.f32.mrb[0].mxu0
    %v470 = vadd.f32 %v211, %v469
    %471 = vmatprep.mubr.f32.mxu0 0.0
    %472 = vmatmul.mubr.f32.gmra.mrb[0].mxu0 %v119
    %v473 = vpop.f32.mrb[0].mxu0
    %v474 = vadd.f32 %v207, %v473
    %v475 = vpop.f32.mrb[0].mxu0
    %v476 = vadd.f32 %v211, %v475
    %477 = vmatprep.mubr.f32.mxu0 0.0
    %478 = vmatmul.mubr.f32.gmra.mrb[0].mxu0 %v120
    %v479 = vpop.f32.mrb[0].mxu0
    %v480 = vadd.f32 %v207, %v479
    %v481 = vpop.f32.mrb[0].mxu0
    %v482 = vadd.f32 %v211, %v481
    %483 = vmatprep.mubr.f32.mxu0 0.0
    %484 = vmatmul.mubr.f32.gmra.mrb[0].mxu0 %v121
    %v485 = vpop.f32.mrb[0].mxu0
    %v486 = vadd.f32 %v207, %v485
    %v487 = vpop.f32.mrb[0].mxu0
    %v488 = vadd.f32 %v211, %v487
    %489 = vmatprep.mubr.f32.mxu0 0.0
    %490 = vmatmul.mubr.f32.gmra.mrb[0].mxu0 %v122
    %v491 = vpop.f32.mrb[0].mxu0
    %v492 = vadd.f32 %v207, %v491
    %v493 = vpop.f32.mrb[0].mxu0
    %v494 = vadd.f32 %v211, %v493
    %495 = vmatprep.mubr.f32.mxu0 0.0
    %496 = vmatmul.mubr.f32.gmra.mrb[0].mxu0 %v123
    %v497 = vpop.f32.mrb[0].mxu0
    %v498 = vadd.f32 %v207, %v497
    %v499 = vpop.f32.mrb[0].mxu0
    %v500 = vadd.f32 %v211, %v499
    %501 = vmatprep.mubr.f32.mxu0 0.0
    %502 = vmatmul.mubr.f32.gmra.mrb[0].mxu0 %v124
    %v503 = vpop.f32.mrb[0].mxu0
    %v504 = vadd.f32 %v207, %v503
    %v505 = vpop.f32.mrb[0].mxu0
    %v506 = vadd.f32 %v211, %v505
    %507 = vmatprep.mubr.f32.mxu0 0.0
    %508 = vmatmul.mubr.f32.gmra.mrb[0].mxu0 %v125
    %v509 = vpop.f32.mrb[0].mxu0
    %v510 = vadd.f32 %v207, %v509
    %v511 = vpop.f32.mrb[0].mxu0
    %v512 = vadd.f32 %v211, %v511
    %513 = vmatprep.mubr.f32.mxu0 0.0
    %514 = vmatmul.mubr.f32.gmra.mrb[0].mxu0 %v126
    %v515 = vpop.f32.mrb[0].mxu0
    %v516 = vadd.f32 %v207, %v515
    %v517 = vpop.f32.mrb[0].mxu0
    %v518 = vadd.f32 %v211, %v517
    %519 = vmatprep.mubr.f32.mxu0 0.0
    %520 = vmatmul.mubr.f32.gmra.mrb[0].mxu0 %v127
    %v521 = vpop.f32.mrb[0].mxu0
    %v522 = vadd.f32 %v207, %v521
    %v523 = vpop.f32.mrb[0].mxu0
    %v524 = vadd.f32 %v211, %v523
    %525 = vmatprep.mubr.f32.mxu0 0.0
    %526 = vmatmul.mubr.f32.gmra.mrb[0].mxu0 %v128
    %v527 = vpop.f32.mrb[0].mxu0
    %v528 = vadd.f32 %v207, %v527
    %v529 = vpop.f32.mrb[0].mxu0
    %v530 = vadd.f32 %v211, %v529
    %531 = vmatprep.mubr.f32.mxu0 0.0
    %532 = vmatmul.mubr.f32.gmra.mrb[0].mxu0 %v129
    %v533 = vpop.f32.mrb[0].mxu0
    %v534 = vadd.f32 %v207, %v533
    %v535 = vpop.f32.mrb[0].mxu0
    %v536 = vadd.f32 %v211, %v535
    %537 = vdwg.mxu0
    %v538 = vmul.f32 %v283, 0.5
    %v539 = vmul.f32 %v285, 0.5
    %v540 = vmul.f32 %v444, 0.5
    %v541 = vmul.f32 %v446, 0.5
    %v542 = vmul.f32 %v289, 0.5
    %v543 = vmul.f32 %v291, 0.5
    %v544 = vmul.f32 %v450, 0.5
    %v545 = vmul.f32 %v452, 0.5
    %v546 = vmul.f32 %v295, 0.5
    %v547 = vmul.f32 %v297, 0.5
    %v548 = vmul.f32 %v456, 0.5
    %v549 = vmul.f32 %v458, 0.5
    %v550 = vmul.f32 %v301, 0.5
    %v551 = vmul.f32 %v303, 0.5
    %v552 = vmul.f32 %v462, 0.5
    %v553 = vmul.f32 %v464, 0.5
    %v554 = vmul.f32 %v307, 0.5
    %v555 = vmul.f32 %v309, 0.5
    %v556 = vmul.f32 %v468, 0.5
    %v557 = vmul.f32 %v470, 0.5
    %v558 = vmul.f32 %v313, 0.5
    %v559 = vmul.f32 %v315, 0.5
    %v560 = vmul.f32 %v474, 0.5
    %v561 = vmul.f32 %v476, 0.5
    %v562 = vmul.f32 %v319, 0.5
    %v563 = vmul.f32 %v321, 0.5
    %v564 = vmul.f32 %v480, 0.5
    %v565 = vmul.f32 %v482, 0.5
    %v566 = vmul.f32 %v325, 0.5
    %v567 = vmul.f32 %v327, 0.5
    %v568 = vmul.f32 %v486, 0.5
    %v569 = vmul.f32 %v488, 0.5
    %v570 = vmul.f32 %v331, 0.5
    %v571 = vmul.f32 %v333, 0.5
    %v572 = vmul.f32 %v492, 0.5
    %v573 = vmul.f32 %v494, 0.5
    %v574 = vmul.f32 %v337, 0.5
    %v575 = vmul.f32 %v339, 0.5
    %v576 = vmul.f32 %v498, 0.5
    %v577 = vmul.f32 %v500, 0.5
    %v578 = vmul.f32 %v343, 0.5
    %v579 = vmul.f32 %v345, 0.5
    %v580 = vmul.f32 %v504, 0.5
    %v581 = vmul.f32 %v506, 0.5
    %v582 = vmul.f32 %v349, 0.5
    %v583 = vmul.f32 %v351, 0.5
    %v584 = vmul.f32 %v510, 0.5
    %v585 = vmul.f32 %v512, 0.5
    %v586 = vmul.f32 %v355, 0.5
    %v587 = vmul.f32 %v357, 0.5
    %v588 = vmul.f32 %v516, 0.5
    %v589 = vmul.f32 %v518, 0.5
    %v590 = vmul.f32 %v361, 0.5
    %v591 = vmul.f32 %v363, 0.5
    %v592 = vmul.f32 %v522, 0.5
    %v593 = vmul.f32 %v524, 0.5
    %v594 = vmul.f32 %v367, 0.5
    %v595 = vmul.f32 %v369, 0.5
    %v596 = vmul.f32 %v528, 0.5
    %v597 = vmul.f32 %v530, 0.5
    %v598 = vmul.f32 %v373, 0.5
    %v599 = vmul.f32 %v375, 0.5
    %v600 = vmul.f32 %v534, 0.5
    %v601 = vmul.f32 %v536, 0.5
    %v602 = vmul.f32 %v283, 0.70710677
    %v603 = vmul.f32 %v285, 0.70710677
    %v604 = vmul.f32 %v444, 0.70710677
    %v605 = vmul.f32 %v446, 0.70710677
    %v606 = vmul.f32 %v289, 0.70710677
    %v607 = vmul.f32 %v291, 0.70710677
    %v608 = vmul.f32 %v450, 0.70710677
    %v609 = vmul.f32 %v452, 0.70710677
    %v610 = vmul.f32 %v295, 0.70710677
    %v611 = vmul.f32 %v297, 0.70710677
    %v612 = vmul.f32 %v456, 0.70710677
    %v613 = vmul.f32 %v458, 0.70710677
    %v614 = vmul.f32 %v301, 0.70710677
    %v615 = vmul.f32 %v303, 0.70710677
    %v616 = vmul.f32 %v462, 0.70710677
    %v617 = vmul.f32 %v464, 0.70710677
    %v618 = vmul.f32 %v307, 0.70710677
    %v619 = vmul.f32 %v309, 0.70710677
    %v620 = vmul.f32 %v468, 0.70710677
    %v621 = vmul.f32 %v470, 0.70710677
    %v622 = vmul.f32 %v313, 0.70710677
    %v623 = vmul.f32 %v315, 0.70710677
    %v624 = vmul.f32 %v474, 0.70710677
    %v625 = vmul.f32 %v476, 0.70710677
    %v626 = vmul.f32 %v319, 0.70710677
    %v627 = vmul.f32 %v321, 0.70710677
    %v628 = vmul.f32 %v480, 0.70710677
    %v629 = vmul.f32 %v482, 0.70710677
    %v630 = vmul.f32 %v325, 0.70710677
    %v631 = vmul.f32 %v327, 0.70710677
    %v632 = vmul.f32 %v486, 0.70710677
    %v633 = vmul.f32 %v488, 0.70710677
    %v634 = vmul.f32 %v331, 0.70710677
    %v635 = vmul.f32 %v333, 0.70710677
    %v636 = vmul.f32 %v492, 0.70710677
    %v637 = vmul.f32 %v494, 0.70710677
    %v638 = vmul.f32 %v337, 0.70710677
    %v639 = vmul.f32 %v339, 0.70710677
    %v640 = vmul.f32 %v498, 0.70710677
    %v641 = vmul.f32 %v500, 0.70710677
    %v642 = vmul.f32 %v343, 0.70710677
    %v643 = vmul.f32 %v345, 0.70710677
    %v644 = vmul.f32 %v504, 0.70710677
    %v645 = vmul.f32 %v506, 0.70710677
    %v646 = vmul.f32 %v349, 0.70710677
    %v647 = vmul.f32 %v351, 0.70710677
    %v648 = vmul.f32 %v510, 0.70710677
    %v649 = vmul.f32 %v512, 0.70710677
    %v650 = vmul.f32 %v355, 0.70710677
    %v651 = vmul.f32 %v357, 0.70710677
    %v652 = vmul.f32 %v516, 0.70710677
    %v653 = vmul.f32 %v518, 0.70710677
    %v654 = vmul.f32 %v361, 0.70710677
    %v655 = vmul.f32 %v363, 0.70710677
    %v656 = vmul.f32 %v522, 0.70710677
    %v657 = vmul.f32 %v524, 0.70710677
    %v658 = vmul.f32 %v367, 0.70710677
    %v659 = vmul.f32 %v369, 0.70710677
    %v660 = vmul.f32 %v528, 0.70710677
    %v661 = vmul.f32 %v530, 0.70710677
    %v662 = vmul.f32 %v373, 0.70710677
    %v663 = vmul.f32 %v375, 0.70710677
    %v664 = vmul.f32 %v534, 0.70710677
    %v665 = vmul.f32 %v536, 0.70710677
    %v666 = verf.f32.pop %v602
    %v667 = verf.f32.pop %v603
    %v668 = verf.f32.pop %v604
    %v669 = verf.f32.pop %v605
    %v670 = verf.f32.pop %v606
    %v671 = verf.f32.pop %v607
    %v672 = verf.f32.pop %v608
    %v673 = verf.f32.pop %v609
    %v674 = verf.f32.pop %v610
    %v675 = verf.f32.pop %v611
    %v676 = verf.f32.pop %v612
    %v677 = verf.f32.pop %v613
    %v678 = verf.f32.pop %v614
    %v679 = verf.f32.pop %v615
    %v680 = verf.f32.pop %v616
    %v681 = verf.f32.pop %v617
    %v682 = verf.f32.pop %v618
    %v683 = verf.f32.pop %v619
    %v684 = verf.f32.pop %v620
    %v685 = verf.f32.pop %v621
    %v686 = verf.f32.pop %v622
    %v687 = verf.f32.pop %v623
    %v688 = verf.f32.pop %v624
    %v689 = verf.f32.pop %v625
    %v690 = verf.f32.pop %v626
    %v691 = verf.f32.pop %v627
    %v692 = verf.f32.pop %v628
    %v693 = verf.f32.pop %v629
    %v694 = verf.f32.pop %v630
    %v695 = verf.f32.pop %v631
    %v696 = verf.f32.pop %v632
    %v697 = verf.f32.pop %v633
    %v698 = verf.f32.pop %v634
    %v699 = verf.f32.pop %v635
    %v700 = verf.f32.pop %v636
    %v701 = verf.f32.pop %v637
    %v702 = verf.f32.pop %v638
    %v703 = verf.f32.pop %v639
    %v704 = verf.f32.pop %v640
    %v705 = verf.f32.pop %v641
    %v706 = verf.f32.pop %v642
    %v707 = verf.f32.pop %v643
    %v708 = verf.f32.pop %v644
    %v709 = verf.f32.pop %v645
    %v710 = verf.f32.pop %v646
    %v711 = verf.f32.pop %v647
    %v712 = verf.f32.pop %v648
    %v713 = verf.f32.pop %v649
    %v714 = verf.f32.pop %v650
    %v715 = verf.f32.pop %v651
    %v716 = verf.f32.pop %v652
    %v717 = verf.f32.pop %v653
    %v718 = verf.f32.pop %v654
    %v719 = verf.f32.pop %v655
    %v720 = verf.f32.pop %v656
    %v721 = verf.f32.pop %v657
    %v722 = verf.f32.pop %v658
    %v723 = verf.f32.pop %v659
    %v724 = verf.f32.pop %v660
    %v725 = verf.f32.pop %v661
    %v726 = verf.f32.pop %v662
    %v727 = verf.f32.pop %v663
    %v728 = verf.f32.pop %v664
    %v729 = verf.f32.pop %v665
    %v730 = vadd.f32 %v666, 1.0
    %v731 = vadd.f32 %v667, 1.0
    %v732 = vadd.f32 %v668, 1.0
    %v733 = vadd.f32 %v669, 1.0
    %v734 = vadd.f32 %v670, 1.0
    %v735 = vadd.f32 %v671, 1.0
    %v736 = vadd.f32 %v672, 1.0
    %v737 = vadd.f32 %v673, 1.0
    %v738 = vadd.f32 %v674, 1.0
    %v739 = vadd.f32 %v675, 1.0
    %v740 = vadd.f32 %v676, 1.0
    %v741 = vadd.f32 %v677, 1.0
    %v742 = vadd.f32 %v678, 1.0
    %v743 = vadd.f32 %v679, 1.0
    %v744 = vadd.f32 %v680, 1.0
    %v745 = vadd.f32 %v681, 1.0
    %v746 = vadd.f32 %v682, 1.0
    %v747 = vadd.f32 %v683, 1.0
    %v748 = vadd.f32 %v684, 1.0
    %v749 = vadd.f32 %v685, 1.0
    %v750 = vadd.f32 %v686, 1.0
    %v751 = vadd.f32 %v687, 1.0
    %v752 = vadd.f32 %v688, 1.0
    %v753 = vadd.f32 %v689, 1.0
    %v754 = vadd.f32 %v690, 1.0
    %v755 = vadd.f32 %v691, 1.0
    %v756 = vadd.f32 %v692, 1.0
    %v757 = vadd.f32 %v693, 1.0
    %v758 = vadd.f32 %v694, 1.0
    %v759 = vadd.f32 %v695, 1.0
    %v760 = vadd.f32 %v696, 1.0
    %v761 = vadd.f32 %v697, 1.0
    %v762 = vadd.f32 %v698, 1.0
    %v763 = vadd.f32 %v699, 1.0
    %v764 = vadd.f32 %v700, 1.0
    %v765 = vadd.f32 %v701, 1.0
    %v766 = vadd.f32 %v702, 1.0
    %v767 = vadd.f32 %v703, 1.0
    %v768 = vadd.f32 %v704, 1.0
    %v769 = vadd.f32 %v705, 1.0
    %v770 = vadd.f32 %v706, 1.0
    %v771 = vadd.f32 %v707, 1.0
    %v772 = vadd.f32 %v708, 1.0
    %v773 = vadd.f32 %v709, 1.0
    %v774 = vadd.f32 %v710, 1.0
    %v775 = vadd.f32 %v711, 1.0
    %v776 = vadd.f32 %v712, 1.0
    %v777 = vadd.f32 %v713, 1.0
    %v778 = vadd.f32 %v714, 1.0
    %v779 = vadd.f32 %v715, 1.0
    %v780 = vadd.f32 %v716, 1.0
    %v781 = vadd.f32 %v717, 1.0
    %v782 = vadd.f32 %v718, 1.0
    %v783 = vadd.f32 %v719, 1.0
    %v784 = vadd.f32 %v720, 1.0
    %v785 = vadd.f32 %v721, 1.0
    %v786 = vadd.f32 %v722, 1.0
    %v787 = vadd.f32 %v723, 1.0
    %v788 = vadd.f32 %v724, 1.0
    %v789 = vadd.f32 %v725, 1.0
    %v790 = vadd.f32 %v726, 1.0
    %v791 = vadd.f32 %v727, 1.0
    %v792 = vadd.f32 %v728, 1.0
    %v793 = vadd.f32 %v729, 1.0
    %v794 = vmul.f32 %v538, %v730
    %v795 = vmul.f32 %v539, %v731
    %v796 = vmul.f32 %v540, %v732
    %v797 = vmul.f32 %v541, %v733
    %v798 = vmul.f32 %v542, %v734
    %v799 = vmul.f32 %v543, %v735
    %v800 = vmul.f32 %v544, %v736
    %v801 = vmul.f32 %v545, %v737
    %v802 = vmul.f32 %v546, %v738
    %v803 = vmul.f32 %v547, %v739
    %v804 = vmul.f32 %v548, %v740
    %v805 = vmul.f32 %v549, %v741
    %v806 = vmul.f32 %v550, %v742
    %v807 = vmul.f32 %v551, %v743
    %v808 = vmul.f32 %v552, %v744
    %v809 = vmul.f32 %v553, %v745
    %v810 = vmul.f32 %v554, %v746
    %v811 = vmul.f32 %v555, %v747
    %v812 = vmul.f32 %v556, %v748
    %v813 = vmul.f32 %v557, %v749
    %v814 = vmul.f32 %v558, %v750
    %v815 = vmul.f32 %v559, %v751
    %v816 = vmul.f32 %v560, %v752
    %v817 = vmul.f32 %v561, %v753
    %v818 = vmul.f32 %v562, %v754
    %v819 = vmul.f32 %v563, %v755
    %v820 = vmul.f32 %v564, %v756
    %v821 = vmul.f32 %v565, %v757
    %v822 = vmul.f32 %v566, %v758
    %v823 = vmul.f32 %v567, %v759
    %v824 = vmul.f32 %v568, %v760
    %v825 = vmul.f32 %v569, %v761
    %v826 = vmul.f32 %v570, %v762
    %v827 = vmul.f32 %v571, %v763
    %v828 = vmul.f32 %v572, %v764
    %v829 = vmul.f32 %v573, %v765
    %v830 = vmul.f32 %v574, %v766
    %v831 = vmul.f32 %v575, %v767
    %v832 = vmul.f32 %v576, %v768
    %v833 = vmul.f32 %v577, %v769
    %v834 = vmul.f32 %v578, %v770
    %v835 = vmul.f32 %v579, %v771
    %v836 = vmul.f32 %v580, %v772
    %v837 = vmul.f32 %v581, %v773
    %v838 = vmul.f32 %v582, %v774
    %v839 = vmul.f32 %v583, %v775
    %v840 = vmul.f32 %v584, %v776
    %v841 = vmul.f32 %v585, %v777
    %v842 = vmul.f32 %v586, %v778
    %v843 = vmul.f32 %v587, %v779
    %v844 = vmul.f32 %v588, %v780
    %v845 = vmul.f32 %v589, %v781
    %v846 = vmul.f32 %v590, %v782
    %v847 = vmul.f32 %v591, %v783
    %v848 = vmul.f32 %v592, %v784
    %v849 = vmul.f32 %v593, %v785
    %v850 = vmul.f32 %v594, %v786
    %v851 = vmul.f32 %v595, %v787
    %v852 = vmul.f32 %v596, %v788
    %v853 = vmul.f32 %v597, %v789
    %v854 = vmul.f32 %v598, %v790
    %v855 = vmul.f32 %v599, %v791
    %v856 = vmul.f32 %v600, %v792
    %v857 = vmul.f32 %v601, %v793
    %v858 = vld [vmem:[#allocation8] sm:$0xff]
    %v859 = vld [vmem:[#allocation8 + $0x8] sm:$0xff]
    %v860 = vld [vmem:[#allocation8 + $0x10] sm:$0xff]
    %v861 = vld [vmem:[#allocation8 + $0x18] sm:$0xff]
    %v862 = vld [vmem:[#allocation8 + $0x20] sm:$0xff]
    %v863 = vld [vmem:[#allocation8 + $0x28] sm:$0xff]
    %v864 = vld [vmem:[#allocation8 + $0x30] sm:$0xff]
    %v865 = vld [vmem:[#allocation8 + $0x38] sm:$0xff]
    %v866 = vld [vmem:[#allocation8 + $0x40] sm:$0xff]
    %v867 = vld [vmem:[#allocation8 + $0x48] sm:$0xff]
    %v868 = vld [vmem:[#allocation8 + $0x50] sm:$0xff]
    %v869 = vld [vmem:[#allocation8 + $0x58] sm:$0xff]
    %v870 = vld [vmem:[#allocation8 + $0x60] sm:$0xff]
    %v871 = vld [vmem:[#allocation8 + $0x68] sm:$0xff]
    %v872 = vld [vmem:[#allocation8 + $0x70] sm:$0xff]
    %v873 = vld [vmem:[#allocation8 + $0x78] sm:$0xff]
    %v874 = vld [vmem:[#allocation8 + $0x80] sm:$0xff]
    %v875 = vld [vmem:[#allocation8 + $0x88] sm:$0xff]
    %v876 = vld [vmem:[#allocation8 + $0x90] sm:$0xff]
    %v877 = vld [vmem:[#allocation8 + $0x98] sm:$0xff]
    %v878 = vld [vmem:[#allocation8 + $0xa0] sm:$0xff]
    %v879 = vld [vmem:[#allocation8 + $0xa8] sm:$0xff]
    %v880 = vld [vmem:[#allocation8 + $0xb0] sm:$0xff]
    %v881 = vld [vmem:[#allocation8 + $0xb8] sm:$0xff]
    %v882 = vld [vmem:[#allocation8 + $0xc0] sm:$0xff]
    %v883 = vld [vmem:[#allocation8 + $0xc8] sm:$0xff]
    %v884 = vld [vmem:[#allocation8 + $0xd0] sm:$0xff]
    %v885 = vld [vmem:[#allocation8 + $0xd8] sm:$0xff]
    %v886 = vld [vmem:[#allocation8 + $0xe0] sm:$0xff]
    %v887 = vld [vmem:[#allocation8 + $0xe8] sm:$0xff]
    %v888 = vld [vmem:[#allocation8 + $0xf0] sm:$0xff]
    %v889 = vld [vmem:[#allocation8 + $0xf8] sm:$0xff]
    %v890 = vld [vmem:[#allocation8 + $0x100] sm:$0xff]
    %v891 = vld [vmem:[#allocation8 + $0x108] sm:$0xff]
    %v892 = vld [vmem:[#allocation8 + $0x110] sm:$0xff]
    %v893 = vld [vmem:[#allocation8 + $0x118] sm:$0xff]
    %v894 = vld [vmem:[#allocation8 + $0x120] sm:$0xff]
    %v895 = vld [vmem:[#allocation8 + $0x128] sm:$0xff]
    %v896 = vld [vmem:[#allocation8 + $0x130] sm:$0xff]
    %v897 = vld [vmem:[#allocation8 + $0x138] sm:$0xff]
    %v898 = vld [vmem:[#allocation8 + $0x140] sm:$0xff]
    %v899 = vld [vmem:[#allocation8 + $0x148] sm:$0xff]
    %v900 = vld [vmem:[#allocation8 + $0x150] sm:$0xff]
    %v901 = vld [vmem:[#allocation8 + $0x158] sm:$0xff]
    %v902 = vld [vmem:[#allocation8 + $0x160] sm:$0xff]
    %v903 = vld [vmem:[#allocation8 + $0x168] sm:$0xff]
    %v904 = vld [vmem:[#allocation8 + $0x170] sm:$0xff]
    %v905 = vld [vmem:[#allocation8 + $0x178] sm:$0xff]
    %v906 = vld [vmem:[#allocation8 + $0x180] sm:$0xff]
    %v907 = vld [vmem:[#allocation8 + $0x188] sm:$0xff]
    %v908 = vld [vmem:[#allocation8 + $0x190] sm:$0xff]
    %v909 = vld [vmem:[#allocation8 + $0x198] sm:$0xff]
    %v910 = vld [vmem:[#allocation8 + $0x1a0] sm:$0xff]
    %v911 = vld [vmem:[#allocation8 + $0x1a8] sm:$0xff]
    %v912 = vld [vmem:[#allocation8 + $0x1b0] sm:$0xff]
    %v913 = vld [vmem:[#allocation8 + $0x1b8] sm:$0xff]
    %v914 = vld [vmem:[#allocation8 + $0x1c0] sm:$0xff]
    %v915 = vld [vmem:[#allocation8 + $0x1c8] sm:$0xff]
    %v916 = vld [vmem:[#allocation8 + $0x1d0] sm:$0xff]
    %v917 = vld [vmem:[#allocation8 + $0x1d8] sm:$0xff]
    %v918 = vld [vmem:[#allocation8 + $0x1e0] sm:$0xff]
    %v919 = vld [vmem:[#allocation8 + $0x1e8] sm:$0xff]
    %v920 = vld [vmem:[#allocation8 + $0x1f0] sm:$0xff]
    %v921 = vld [vmem:[#allocation8 + $0x1f8] sm:$0xff]
    %v922 = vld [vmem:[#allocation10] sm:$0x1]
    %v924 = vlaneseq
    %v925 = vshrl.u32 %v924, 7
    %v926 = vsub.s32 0, %v925
    %v927 = vrot.slane %v922, %v926
    %929 = vmatprep.subr.mxu0 0.0
    %930 = vmatpush1.msra.mxu0 %v858
    %931 = vmatprep.subr.mxu0 0.0
    %932 = vmatpush1.msra.mxu0 %v859
    %933 = vmatprep.subr.mxu0 0.0
    %934 = vmatpush1.msra.mxu0 %v860
    %935 = vmatprep.subr.mxu0 0.0
    %936 = vmatpush1.msra.mxu0 %v861
    %937 = vmatprep.subr.mxu0 0.0
    %938 = vmatpush1.msra.mxu0 %v862
    %939 = vmatprep.subr.mxu0 0.0
    %940 = vmatpush1.msra.mxu0 %v863
    %941 = vmatprep.subr.mxu0 0.0
    %942 = vmatpush1.msra.mxu0 %v864
    %943 = vmatprep.subr.mxu0 0.0
    %944 = vmatpush1.msra.mxu0 %v865
    %945 = vmatprep.subr.mxu0 0.0
    %946 = vmatpush1.msra.mxu0 %v866
    %947 = vmatprep.subr.mxu0 0.0
    %948 = vmatpush1.msra.mxu0 %v867
    %949 = vmatprep.subr.mxu0 0.0
    %950 = vmatpush1.msra.mxu0 %v868
    %951 = vmatprep.subr.mxu0 0.0
    %952 = vmatpush1.msra.mxu0 %v869
    %953 = vmatprep.subr.mxu0 0.0
    %954 = vmatpush1.msra.mxu0 %v870
    %955 = vmatprep.subr.mxu0 0.0
    %956 = vmatpush1.msra.mxu0 %v871
    %957 = vmatprep.subr.mxu0 0.0
    %958 = vmatpush1.msra.mxu0 %v872
    %959 = vmatprep.subr.mxu0 0.0
    %960 = vmatpush1.msra.mxu0 %v873
    %961 = vmatprep.subr.mxu0 0.0
    %962 = vmatpush1.msra.mxu0 %v874
    %963 = vmatprep.subr.mxu0 0.0
    %964 = vmatpush1.msra.mxu0 %v875
    %965 = vmatprep.subr.mxu0 0.0
    %966 = vmatpush1.msra.mxu0 %v876
    %967 = vmatprep.subr.mxu0 0.0
    %968 = vmatpush1.msra.mxu0 %v877
    %969 = vmatprep.subr.mxu0 0.0
    %970 = vmatpush1.msra.mxu0 %v878
    %971 = vmatprep.subr.mxu0 0.0
    %972 = vmatpush1.msra.mxu0 %v879
    %973 = vmatprep.subr.mxu0 0.0
    %974 = vmatpush1.msra.mxu0 %v880
    %975 = vmatprep.subr.mxu0 0.0
    %976 = vmatpush1.msra.mxu0 %v881
    %977 = vmatprep.subr.mxu0 0.0
    %978 = vmatpush1.msra.mxu0 %v882
    %979 = vmatprep.subr.mxu0 0.0
    %980 = vmatpush1.msra.mxu0 %v883
    %981 = vmatprep.subr.mxu0 0.0
    %982 = vmatpush1.msra.mxu0 %v884
    %983 = vmatprep.subr.mxu0 0.0
    %984 = vmatpush1.msra.mxu0 %v885
    %985 = vmatprep.subr.mxu0 0.0
    %986 = vmatpush1.msra.mxu0 %v886
    %987 = vmatprep.subr.mxu0 0.0
    %988 = vmatpush1.msra.mxu0 %v887
    %989 = vmatprep.subr.mxu0 0.0
    %990 = vmatpush1.msra.mxu0 %v888
    %991 = vmatprep.subr.mxu0 0.0
    %992 = vmatpush1.msra.mxu0 %v889
    %993 = vmatprep.mubr.f32.mxu0 %v795
    %994 = vmatmul.mubr.f32.gmra.mrb[0].mxu0 %v794
    %v995 = vpop.f32.mrb[0].mxu0
    %v996 = vadd.f32 %v927, %v995
    %v997 = vpop.f32.mrb[0].mxu0
    %998 = vmatprep.mubr.f32.mxu0 %v799
    %999 = vmatmul.mubr.f32.gmra.mrb[0].mxu0 %v798
    %v1000 = vpop.f32.mrb[0].mxu0
    %v1001 = vadd.f32 %v927, %v1000
    %v1002 = vpop.f32.mrb[0].mxu0
    %1003 = vmatprep.mubr.f32.mxu0 %v803
    %1004 = vmatmul.mubr.f32.gmra.mrb[0].mxu0 %v802
    %v1005 = vpop.f32.mrb[0].mxu0
    %v1006 = vadd.f32 %v927, %v1005
    %v1007 = vpop.f32.mrb[0].mxu0
    %1008 = vmatprep.mubr.f32.mxu0 %v807
    %1009 = vmatmul.mubr.f32.gmra.mrb[0].mxu0 %v806
    %v1010 = vpop.f32.mrb[0].mxu0
    %v1011 = vadd.f32 %v927, %v1010
    %v1012 = vpop.f32.mrb[0].mxu0
    %1013 = vmatprep.mubr.f32.mxu0 %v811
    %1014 = vmatmul.mubr.f32.gmra.mrb[0].mxu0 %v810
    %v1015 = vpop.f32.mrb[0].mxu0
    %v1016 = vadd.f32 %v927, %v1015
    %v1017 = vpop.f32.mrb[0].mxu0
    %1018 = vmatprep.mubr.f32.mxu0 %v815
    %1019 = vmatmul.mubr.f32.gmra.mrb[0].mxu0 %v814
    %v1020 = vpop.f32.mrb[0].mxu0
    %v1021 = vadd.f32 %v927, %v1020
    %v1022 = vpop.f32.mrb[0].mxu0
    %1023 = vmatprep.mubr.f32.mxu0 %v819
    %1024 = vmatmul.mubr.f32.gmra.mrb[0].mxu0 %v818
    %v1025 = vpop.f32.mrb[0].mxu0
    %v1026 = vadd.f32 %v927, %v1025
    %v1027 = vpop.f32.mrb[0].mxu0
    %1028 = vmatprep.mubr.f32.mxu0 %v823
    %1029 = vmatmul.mubr.f32.gmra.mrb[0].mxu0 %v822
    %v1030 = vpop.f32.mrb[0].mxu0
    %v1031 = vadd.f32 %v927, %v1030
    %v1032 = vpop.f32.mrb[0].mxu0
    %1033 = vmatprep.mubr.f32.mxu0 %v827
    %1034 = vmatmul.mubr.f32.gmra.mrb[0].mxu0 %v826
    %v1035 = vpop.f32.mrb[0].mxu0
    %v1036 = vadd.f32 %v927, %v1035
    %v1037 = vpop.f32.mrb[0].mxu0
    %1038 = vmatprep.mubr.f32.mxu0 %v831
    %1039 = vmatmul.mubr.f32.gmra.mrb[0].mxu0 %v830
    %v1040 = vpop.f32.mrb[0].mxu0
    %v1041 = vadd.f32 %v927, %v1040
    %v1042 = vpop.f32.mrb[0].mxu0
    %1043 = vmatprep.mubr.f32.mxu0 %v835
    %1044 = vmatmul.mubr.f32.gmra.mrb[0].mxu0 %v834
    %v1045 = vpop.f32.mrb[0].mxu0
    %v1046 = vadd.f32 %v927, %v1045
    %v1047 = vpop.f32.mrb[0].mxu0
    %1048 = vmatprep.mubr.f32.mxu0 %v839
    %1049 = vmatmul.mubr.f32.gmra.mrb[0].mxu0 %v838
    %v1050 = vpop.f32.mrb[0].mxu0
    %v1051 = vadd.f32 %v927, %v1050
    %v1052 = vpop.f32.mrb[0].mxu0
    %1053 = vmatprep.mubr.f32.mxu0 %v843
    %1054 = vmatmul.mubr.f32.gmra.mrb[0].mxu0 %v842
    %v1055 = vpop.f32.mrb[0].mxu0
    %v1056 = vadd.f32 %v927, %v1055
    %v1057 = vpop.f32.mrb[0].mxu0
    %1058 = vmatprep.mubr.f32.mxu0 %v847
    %1059 = vmatmul.mubr.f32.gmra.mrb[0].mxu0 %v846
    %v1060 = vpop.f32.mrb[0].mxu0
    %v1061 = vadd.f32 %v927, %v1060
    %v1062 = vpop.f32.mrb[0].mxu0
    %1063 = vmatprep.mubr.f32.mxu0 %v851
    %1064 = vmatmul.mubr.f32.gmra.mrb[0].mxu0 %v850
    %v1065 = vpop.f32.mrb[0].mxu0
    %v1066 = vadd.f32 %v927, %v1065
    %v1067 = vpop.f32.mrb[0].mxu0
    %1068 = vmatprep.mubr.f32.mxu0 %v855
    %1069 = vmatmul.mubr.f32.gmra.mrb[0].mxu0 %v854
    %v1070 = vpop.f32.mrb[0].mxu0
    %v1071 = vadd.f32 %v927, %v1070
    %v1072 = vpop.f32.mrb[0].mxu0
    %1073 = vdwg.mxu0
    %1074 = vmatprep.subr.mxu0 0.0
    %1075 = vmatpush1.msra.mxu0 %v890
    %1076 = vmatprep.subr.mxu0 0.0
    %1077 = vmatpush1.msra.mxu0 %v891
    %1078 = vmatprep.subr.mxu0 0.0
    %1079 = vmatpush1.msra.mxu0 %v892
    %1080 = vmatprep.subr.mxu0 0.0
    %1081 = vmatpush1.msra.mxu0 %v893
    %1082 = vmatprep.subr.mxu0 0.0
    %1083 = vmatpush1.msra.mxu0 %v894
    %1084 = vmatprep.subr.mxu0 0.0
    %1085 = vmatpush1.msra.mxu0 %v895
    %1086 = vmatprep.subr.mxu0 0.0
    %1087 = vmatpush1.msra.mxu0 %v896
    %1088 = vmatprep.subr.mxu0 0.0
    %1089 = vmatpush1.msra.mxu0 %v897
    %1090 = vmatprep.subr.mxu0 0.0
    %1091 = vmatpush1.msra.mxu0 %v898
    %1092 = vmatprep.subr.mxu0 0.0
    %1093 = vmatpush1.msra.mxu0 %v899
    %1094 = vmatprep.subr.mxu0 0.0
    %1095 = vmatpush1.msra.mxu0 %v900
    %1096 = vmatprep.subr.mxu0 0.0
    %1097 = vmatpush1.msra.mxu0 %v901
    %1098 = vmatprep.subr.mxu0 0.0
    %1099 = vmatpush1.msra.mxu0 %v902
    %1100 = vmatprep.subr.mxu0 0.0
    %1101 = vmatpush1.msra.mxu0 %v903
    %1102 = vmatprep.subr.mxu0 0.0
    %1103 = vmatpush1.msra.mxu0 %v904
    %1104 = vmatprep.subr.mxu0 0.0
    %1105 = vmatpush1.msra.mxu0 %v905
    %1106 = vmatprep.subr.mxu0 0.0
    %1107 = vmatpush1.msra.mxu0 %v906
    %1108 = vmatprep.subr.mxu0 0.0
    %1109 = vmatpush1.msra.mxu0 %v907
    %1110 = vmatprep.subr.mxu0 0.0
    %1111 = vmatpush1.msra.mxu0 %v908
    %1112 = vmatprep.subr.mxu0 0.0
    %1113 = vmatpush1.msra.mxu0 %v909
    %1114 = vmatprep.subr.mxu0 0.0
    %1115 = vmatpush1.msra.mxu0 %v910
    %1116 = vmatprep.subr.mxu0 0.0
    %1117 = vmatpush1.msra.mxu0 %v911
    %1118 = vmatprep.subr.mxu0 0.0
    %1119 = vmatpush1.msra.mxu0 %v912
    %1120 = vmatprep.subr.mxu0 0.0
    %1121 = vmatpush1.msra.mxu0 %v913
    %1122 = vmatprep.subr.mxu0 0.0
    %1123 = vmatpush1.msra.mxu0 %v914
    %1124 = vmatprep.subr.mxu0 0.0
    %1125 = vmatpush1.msra.mxu0 %v915
    %1126 = vmatprep.subr.mxu0 0.0
    %1127 = vmatpush1.msra.mxu0 %v916
    %1128 = vmatprep.subr.mxu0 0.0
    %1129 = vmatpush1.msra.mxu0 %v917
    %1130 = vmatprep.subr.mxu0 0.0
    %1131 = vmatpush1.msra.mxu0 %v918
    %1132 = vmatprep.subr.mxu0 0.0
    %1133 = vmatpush1.msra.mxu0 %v919
    %1134 = vmatprep.subr.mxu0 0.0
    %1135 = vmatpush1.msra.mxu0 %v920
    %1136 = vmatprep.subr.mxu0 0.0
    %1137 = vmatpush1.msra.mxu0 %v921
    %1138 = vmatprep.mubr.f32.mxu0 %v797
    %1139 = vmatmul.mubr.f32.gmra.mrb[0].mxu0 %v796
    %v1140 = vpop.f32.mrb[0].mxu0
    %v1141 = vadd.f32 %v996, %v1140
    %v1142 = vpop.f32.mrb[0].mxu0
    %1143 = vmatprep.mubr.f32.mxu0 %v801
    %1144 = vmatmul.mubr.f32.gmra.mrb[0].mxu0 %v800
    %v1145 = vpop.f32.mrb[0].mxu0
    %v1146 = vadd.f32 %v1001, %v1145
    %v1147 = vpop.f32.mrb[0].mxu0
    %1148 = vmatprep.mubr.f32.mxu0 %v805
    %1149 = vmatmul.mubr.f32.gmra.mrb[0].mxu0 %v804
    %v1150 = vpop.f32.mrb[0].mxu0
    %v1151 = vadd.f32 %v1006, %v1150
    %v1152 = vpop.f32.mrb[0].mxu0
    %1153 = vmatprep.mubr.f32.mxu0 %v809
    %1154 = vmatmul.mubr.f32.gmra.mrb[0].mxu0 %v808
    %v1155 = vpop.f32.mrb[0].mxu0
    %v1156 = vadd.f32 %v1011, %v1155
    %v1157 = vpop.f32.mrb[0].mxu0
    %1158 = vmatprep.mubr.f32.mxu0 %v813
    %1159 = vmatmul.mubr.f32.gmra.mrb[0].mxu0 %v812
    %v1160 = vpop.f32.mrb[0].mxu0
    %v1161 = vadd.f32 %v1016, %v1160
    %v1162 = vpop.f32.mrb[0].mxu0
    %1163 = vmatprep.mubr.f32.mxu0 %v817
    %1164 = vmatmul.mubr.f32.gmra.mrb[0].mxu0 %v816
    %v1165 = vpop.f32.mrb[0].mxu0
    %v1166 = vadd.f32 %v1021, %v1165
    %v1167 = vpop.f32.mrb[0].mxu0
    %1168 = vmatprep.mubr.f32.mxu0 %v821
    %1169 = vmatmul.mubr.f32.gmra.mrb[0].mxu0 %v820
    %v1170 = vpop.f32.mrb[0].mxu0
    %v1171 = vadd.f32 %v1026, %v1170
    %v1172 = vpop.f32.mrb[0].mxu0
    %1173 = vmatprep.mubr.f32.mxu0 %v825
    %1174 = vmatmul.mubr.f32.gmra.mrb[0].mxu0 %v824
    %v1175 = vpop.f32.mrb[0].mxu0
    %v1176 = vadd.f32 %v1031, %v1175
    %v1177 = vpop.f32.mrb[0].mxu0
    %1178 = vmatprep.mubr.f32.mxu0 %v829
    %1179 = vmatmul.mubr.f32.gmra.mrb[0].mxu0 %v828
    %v1180 = vpop.f32.mrb[0].mxu0
    %v1181 = vadd.f32 %v1036, %v1180
    %v1182 = vpop.f32.mrb[0].mxu0
    %1183 = vmatprep.mubr.f32.mxu0 %v833
    %1184 = vmatmul.mubr.f32.gmra.mrb[0].mxu0 %v832
    %v1185 = vpop.f32.mrb[0].mxu0
    %v1186 = vadd.f32 %v1041, %v1185
    %v1187 = vpop.f32.mrb[0].mxu0
    %1188 = vmatprep.mubr.f32.mxu0 %v837
    %1189 = vmatmul.mubr.f32.gmra.mrb[0].mxu0 %v836
    %v1190 = vpop.f32.mrb[0].mxu0
    %v1191 = vadd.f32 %v1046, %v1190
    %v1192 = vpop.f32.mrb[0].mxu0
    %1193 = vmatprep.mubr.f32.mxu0 %v841
    %1194 = vmatmul.mubr.f32.gmra.mrb[0].mxu0 %v840
    %v1195 = vpop.f32.mrb[0].mxu0
    %v1196 = vadd.f32 %v1051, %v1195
    %v1197 = vpop.f32.mrb[0].mxu0
    %1198 = vmatprep.mubr.f32.mxu0 %v845
    %1199 = vmatmul.mubr.f32.gmra.mrb[0].mxu0 %v844
    %v1200 = vpop.f32.mrb[0].mxu0
    %v1201 = vadd.f32 %v1056, %v1200
    %v1202 = vpop.f32.mrb[0].mxu0
    %1203 = vmatprep.mubr.f32.mxu0 %v849
    %1204 = vmatmul.mubr.f32.gmra.mrb[0].mxu0 %v848
    %v1205 = vpop.f32.mrb[0].mxu0
    %v1206 = vadd.f32 %v1061, %v1205
    %v1207 = vpop.f32.mrb[0].mxu0
    %1208 = vmatprep.mubr.f32.mxu0 %v853
    %1209 = vmatmul.mubr.f32.gmra.mrb[0].mxu0 %v852
    %v1210 = vpop.f32.mrb[0].mxu0
    %v1211 = vadd.f32 %v1066, %v1210
    %v1212 = vpop.f32.mrb[0].mxu0
    %1213 = vmatprep.mubr.f32.mxu0 %v857
    %1214 = vmatmul.mubr.f32.gmra.mrb[0].mxu0 %v856
    %v1215 = vpop.f32.mrb[0].mxu0
    %v1216 = vadd.f32 %v1071, %v1215
    %v1217 = vpop.f32.mrb[0].mxu0
    %1218 = vdwg.mxu0
    %v1219 = vadd.f32 %v1141, %v114
    %v1220 = vadd.f32 %v1146, %v115
    %v1221 = vadd.f32 %v1151, %v116
    %v1222 = vadd.f32 %v1156, %v117
    %v1223 = vadd.f32 %v1161, %v118
    %v1224 = vadd.f32 %v1166, %v119
    %v1225 = vadd.f32 %v1171, %v120
    %v1226 = vadd.f32 %v1176, %v121
    %v1227 = vadd.f32 %v1181, %v122
    %v1228 = vadd.f32 %v1186, %v123
    %v1229 = vadd.f32 %v1191, %v124
    %v1230 = vadd.f32 %v1196, %v125
    %v1231 = vadd.f32 %v1201, %v126
    %v1232 = vadd.f32 %v1206, %v127
    %v1233 = vadd.f32 %v1211, %v128
    %v1234 = vadd.f32 %v1216, %v129
    %1235 = vadd.xlane.f32.xlu0 %v1219
    %v1236 = vpop.xlane.xlu0 %1235
    %1237 = vadd.xlane.f32.xlu0 %v1220
    %v1238 = vpop.xlane.xlu0 %1237
    %1239 = vadd.xlane.f32.xlu0 %v1221
    %v1240 = vpop.xlane.xlu0 %1239
    %1241 = vadd.xlane.f32.xlu0 %v1222
    %v1242 = vpop.xlane.xlu0 %1241
    %1243 = vadd.xlane.f32.xlu0 %v1223
    %v1244 = vpop.xlane.xlu0 %1243
    %1245 = vadd.xlane.f32.xlu0 %v1224
    %v1246 = vpop.xlane.xlu0 %1245
    %1247 = vadd.xlane.f32.xlu0 %v1225
    %v1248 = vpop.xlane.xlu0 %1247
    %1249 = vadd.xlane.f32.xlu0 %v1226
    %v1250 = vpop.xlane.xlu0 %1249
    %1251 = vadd.xlane.f32.xlu0 %v1227
    %v1252 = vpop.xlane.xlu0 %1251
    %1253 = vadd.xlane.f32.xlu0 %v1228
    %v1254 = vpop.xlane.xlu0 %1253
    %1255 = vadd.xlane.f32.xlu0 %v1229
    %v1256 = vpop.xlane.xlu0 %1255
    %1257 = vadd.xlane.f32.xlu0 %v1230
    %v1258 = vpop.xlane.xlu0 %1257
    %1259 = vadd.xlane.f32.xlu0 %v1231
    %v1260 = vpop.xlane.xlu0 %1259
    %1261 = vadd.xlane.f32.xlu0 %v1232
    %v1262 = vpop.xlane.xlu0 %1261
    %1263 = vadd.xlane.f32.xlu0 %v1233
    %v1264 = vpop.xlane.xlu0 %1263
    %1265 = vadd.xlane.f32.xlu0 %v1234
    %v1266 = vpop.xlane.xlu0 %1265
    %v1267 = vmul.f32 %v1236, 0.0078125
    %v1268 = vmul.f32 %v1238, 0.0078125
    %v1269 = vmul.f32 %v1240, 0.0078125
    %v1270 = vmul.f32 %v1242, 0.0078125
    %v1271 = vmul.f32 %v1244, 0.0078125
    %v1272 = vmul.f32 %v1246, 0.0078125
    %v1273 = vmul.f32 %v1248, 0.0078125
    %v1274 = vmul.f32 %v1250, 0.0078125
    %v1275 = vmul.f32 %v1252, 0.0078125
    %v1276 = vmul.f32 %v1254, 0.0078125
    %v1277 = vmul.f32 %v1256, 0.0078125
    %v1278 = vmul.f32 %v1258, 0.0078125
    %v1279 = vmul.f32 %v1260, 0.0078125
    %v1280 = vmul.f32 %v1262, 0.0078125
    %v1281 = vmul.f32 %v1264, 0.0078125
    %v1282 = vmul.f32 %v1266, 0.0078125
    %v1283 = vmul.f32 %v1219, %v1219
    %v1284 = vmul.f32 %v1220, %v1220
    %v1285 = vmul.f32 %v1221, %v1221
    %v1286 = vmul.f32 %v1222, %v1222
    %v1287 = vmul.f32 %v1223, %v1223
    %v1288 = vmul.f32 %v1224, %v1224
    %v1289 = vmul.f32 %v1225, %v1225
    %v1290 = vmul.f32 %v1226, %v1226
    %v1291 = vmul.f32 %v1227, %v1227
    %v1292 = vmul.f32 %v1228, %v1228
    %v1293 = vmul.f32 %v1229, %v1229
    %v1294 = vmul.f32 %v1230, %v1230
    %v1295 = vmul.f32 %v1231, %v1231
    %v1296 = vmul.f32 %v1232, %v1232
    %v1297 = vmul.f32 %v1233, %v1233
    %v1298 = vmul.f32 %v1234, %v1234
    %1299 = vadd.xlane.f32.xlu0 %v1283
    %v1300 = vpop.xlane.xlu0 %1299
    %1301 = vadd.xlane.f32.xlu0 %v1284
    %v1302 = vpop.xlane.xlu0 %1301
    %1303 = vadd.xlane.f32.xlu0 %v1285
    %v1304 = vpop.xlane.xlu0 %1303
    %1305 = vadd.xlane.f32.xlu0 %v1286
    %v1306 = vpop.xlane.xlu0 %1305
    %1307 = vadd.xlane.f32.xlu0 %v1287
    %v1308 = vpop.xlane.xlu0 %1307
    %1309 = vadd.xlane.f32.xlu0 %v1288
    %v1310 = vpop.xlane.xlu0 %1309
    %1311 = vadd.xlane.f32.xlu0 %v1289
    %v1312 = vpop.xlane.xlu0 %1311
    %1313 = vadd.xlane.f32.xlu0 %v1290
    %v1314 = vpop.xlane.xlu0 %1313
    %1315 = vadd.xlane.f32.xlu0 %v1291
    %v1316 = vpop.xlane.xlu0 %1315
    %1317 = vadd.xlane.f32.xlu0 %v1292
    %v1318 = vpop.xlane.xlu0 %1317
    %1319 = vadd.xlane.f32.xlu0 %v1293
    %v1320 = vpop.xlane.xlu0 %1319
    %1321 = vadd.xlane.f32.xlu0 %v1294
    %v1322 = vpop.xlane.xlu0 %1321
    %1323 = vadd.xlane.f32.xlu0 %v1295
    %v1324 = vpop.xlane.xlu0 %1323
    %1325 = vadd.xlane.f32.xlu0 %v1296
    %v1326 = vpop.xlane.xlu0 %1325
    %1327 = vadd.xlane.f32.xlu0 %v1297
    %v1328 = vpop.xlane.xlu0 %1327
    %1329 = vadd.xlane.f32.xlu0 %v1298
    %v1330 = vpop.xlane.xlu0 %1329
    %v1331 = vmul.f32 %v1300, 0.0078125
    %v1332 = vmul.f32 %v1302, 0.0078125
    %v1333 = vmul.f32 %v1304, 0.0078125
    %v1334 = vmul.f32 %v1306, 0.0078125
    %v1335 = vmul.f32 %v1308, 0.0078125
    %v1336 = vmul.f32 %v1310, 0.0078125
    %v1337 = vmul.f32 %v1312, 0.0078125
    %v1338 = vmul.f32 %v1314, 0.0078125
    %v1339 = vmul.f32 %v1316, 0.0078125
    %v1340 = vmul.f32 %v1318, 0.0078125
    %v1341 = vmul.f32 %v1320, 0.0078125
    %v1342 = vmul.f32 %v1322, 0.0078125
    %v1343 = vmul.f32 %v1324, 0.0078125
    %v1344 = vmul.f32 %v1326, 0.0078125
    %v1345 = vmul.f32 %v1328, 0.0078125
    %v1346 = vmul.f32 %v1330, 0.0078125
    %v1347 = vmul.f32 %v1267, %v1267
    %v1348 = vmul.f32 %v1268, %v1268
    %v1349 = vmul.f32 %v1269, %v1269
    %v1350 = vmul.f32 %v1270, %v1270
    %v1351 = vmul.f32 %v1271, %v1271
    %v1352 = vmul.f32 %v1272, %v1272
    %v1353 = vmul.f32 %v1273, %v1273
    %v1354 = vmul.f32 %v1274, %v1274
    %v1355 = vmul.f32 %v1275, %v1275
    %v1356 = vmul.f32 %v1276, %v1276
    %v1357 = vmul.f32 %v1277, %v1277
    %v1358 = vmul.f32 %v1278, %v1278
    %v1359 = vmul.f32 %v1279, %v1279
    %v1360 = vmul.f32 %v1280, %v1280
    %v1361 = vmul.f32 %v1281, %v1281
    %v1362 = vmul.f32 %v1282, %v1282
    %v1363 = vsub.f32 %v1331, %v1347
    %v1364 = vsub.f32 %v1332, %v1348
    %v1365 = vsub.f32 %v1333, %v1349
    %v1366 = vsub.f32 %v1334, %v1350
    %v1367 = vsub.f32 %v1335, %v1351
    %v1368 = vsub.f32 %v1336, %v1352
    %v1369 = vsub.f32 %v1337, %v1353
    %v1370 = vsub.f32 %v1338, %v1354
    %v1371 = vsub.f32 %v1339, %v1355
    %v1372 = vsub.f32 %v1340, %v1356
    %v1373 = vsub.f32 %v1341, %v1357
    %v1374 = vsub.f32 %v1342, %v1358
    %v1375 = vsub.f32 %v1343, %v1359
    %v1376 = vsub.f32 %v1344, %v1360
    %v1377 = vsub.f32 %v1345, %v1361
    %v1378 = vsub.f32 %v1346, %v1362
    %v1379 = vmax.f32 %v1363, 0.0
    %v1380 = vmax.f32 %v1364, 0.0
    %v1381 = vmax.f32 %v1365, 0.0
    %v1382 = vmax.f32 %v1366, 0.0
    %v1383 = vmax.f32 %v1367, 0.0
    %v1384 = vmax.f32 %v1368, 0.0
    %v1385 = vmax.f32 %v1369, 0.0
    %v1386 = vmax.f32 %v1370, 0.0
    %v1387 = vmax.f32 %v1371, 0.0
    %v1388 = vmax.f32 %v1372, 0.0
    %v1389 = vmax.f32 %v1373, 0.0
    %v1390 = vmax.f32 %v1374, 0.0
    %v1391 = vmax.f32 %v1375, 0.0
    %v1392 = vmax.f32 %v1376, 0.0
    %v1393 = vmax.f32 %v1377, 0.0
    %v1394 = vmax.f32 %v1378, 0.0
    %v1395 = vsub.f32 %v1219, %v1267
    %v1396 = vsub.f32 %v1220, %v1268
    %v1397 = vsub.f32 %v1221, %v1269
    %v1398 = vsub.f32 %v1222, %v1270
    %v1399 = vsub.f32 %v1223, %v1271
    %v1400 = vsub.f32 %v1224, %v1272
    %v1401 = vsub.f32 %v1225, %v1273
    %v1402 = vsub.f32 %v1226, %v1274
    %v1403 = vsub.f32 %v1227, %v1275
    %v1404 = vsub.f32 %v1228, %v1276
    %v1405 = vsub.f32 %v1229, %v1277
    %v1406 = vsub.f32 %v1230, %v1278
    %v1407 = vsub.f32 %v1231, %v1279
    %v1408 = vsub.f32 %v1232, %v1280
    %v1409 = vsub.f32 %v1233, %v1281
    %v1410 = vsub.f32 %v1234, %v1282
    %v1411 = vadd.f32 %v1379, 1e-05
    %v1412 = vadd.f32 %v1380, 1e-05
    %v1413 = vadd.f32 %v1381, 1e-05
    %v1414 = vadd.f32 %v1382, 1e-05
    %v1415 = vadd.f32 %v1383, 1e-05
    %v1416 = vadd.f32 %v1384, 1e-05
    %v1417 = vadd.f32 %v1385, 1e-05
    %v1418 = vadd.f32 %v1386, 1e-05
    %v1419 = vadd.f32 %v1387, 1e-05
    %v1420 = vadd.f32 %v1388, 1e-05
    %v1421 = vadd.f32 %v1389, 1e-05
    %v1422 = vadd.f32 %v1390, 1e-05
    %v1423 = vadd.f32 %v1391, 1e-05
    %v1424 = vadd.f32 %v1392, 1e-05
    %v1425 = vadd.f32 %v1393, 1e-05
    %v1426 = vadd.f32 %v1394, 1e-05
    %v1427 = vrsqrt.pop %v1411
    %v1428 = vrsqrt.pop %v1412
    %v1429 = vrsqrt.pop %v1413
    %v1430 = vrsqrt.pop %v1414
    %v1431 = vrsqrt.pop %v1415
    %v1432 = vrsqrt.pop %v1416
    %v1433 = vrsqrt.pop %v1417
    %v1434 = vrsqrt.pop %v1418
    %v1435 = vrsqrt.pop %v1419
    %v1436 = vrsqrt.pop %v1420
    %v1437 = vrsqrt.pop %v1421
    %v1438 = vrsqrt.pop %v1422
    %v1439 = vrsqrt.pop %v1423
    %v1440 = vrsqrt.pop %v1424
    %v1441 = vrsqrt.pop %v1425
    %v1442 = vrsqrt.pop %v1426
    %v1443 = vmul.f32 %v1395, %v1427
    %v1444 = vmul.f32 %v1396, %v1428
    %v1445 = vmul.f32 %v1397, %v1429
    %v1446 = vmul.f32 %v1398, %v1430
    %v1447 = vmul.f32 %v1399, %v1431
    %v1448 = vmul.f32 %v1400, %v1432
    %v1449 = vmul.f32 %v1401, %v1433
    %v1450 = vmul.f32 %v1402, %v1434
    %v1451 = vmul.f32 %v1403, %v1435
    %v1452 = vmul.f32 %v1404, %v1436
    %v1453 = vmul.f32 %v1405, %v1437
    %v1454 = vmul.f32 %v1406, %v1438
    %v1455 = vmul.f32 %v1407, %v1439
    %v1456 = vmul.f32 %v1408, %v1440
    %v1457 = vmul.f32 %v1409, %v1441
    %v1458 = vmul.f32 %v1410, %v1442
    %v1459 = vld [vmem:[#allocation11] sm:$0x1]
    %v1461 = vlaneseq
    %v1462 = vshrl.u32 %v1461, 7
    %v1463 = vsub.s32 0, %v1462
    %v1464 = vrot.slane %v1459, %v1463
    %v1466 = vmul.f32 %v1443, %v1464
    %v1467 = vmul.f32 %v1444, %v1464
    %v1468 = vmul.f32 %v1445, %v1464
    %v1469 = vmul.f32 %v1446, %v1464
    %v1470 = vmul.f32 %v1447, %v1464
    %v1471 = vmul.f32 %v1448, %v1464
    %v1472 = vmul.f32 %v1449, %v1464
    %v1473 = vmul.f32 %v1450, %v1464
    %v1474 = vmul.f32 %v1451, %v1464
    %v1475 = vmul.f32 %v1452, %v1464
    %v1476 = vmul.f32 %v1453, %v1464
    %v1477 = vmul.f32 %v1454, %v1464
    %v1478 = vmul.f32 %v1455, %v1464
    %v1479 = vmul.f32 %v1456, %v1464
    %v1480 = vmul.f32 %v1457, %v1464
    %v1481 = vmul.f32 %v1458, %v1464
    %v1482 = vld [vmem:[#allocation13] sm:$0x1]
    %v1484 = vlaneseq
    %v1485 = vshrl.u32 %v1484, 7
    %v1486 = vsub.s32 0, %v1485
    %v1487 = vrot.slane %v1482, %v1486
    %v1489 = vadd.f32 %v1466, %v1487
    %v1490 = vadd.f32 %v1467, %v1487
    %v1491 = vadd.f32 %v1468, %v1487
    %v1492 = vadd.f32 %v1469, %v1487
    %v1493 = vadd.f32 %v1470, %v1487
    %v1494 = vadd.f32 %v1471, %v1487
    %v1495 = vadd.f32 %v1472, %v1487
    %v1496 = vadd.f32 %v1473, %v1487
    %v1497 = vadd.f32 %v1474, %v1487
    %v1498 = vadd.f32 %v1475, %v1487
    %v1499 = vadd.f32 %v1476, %v1487
    %v1500 = vadd.f32 %v1477, %v1487
    %v1501 = vadd.f32 %v1478, %v1487
    %v1502 = vadd.f32 %v1479, %v1487
    %v1503 = vadd.f32 %v1480, %v1487
    %v1504 = vadd.f32 %v1481, %v1487
    %1505 = vst [vmem:[#allocation14] sm:$0xff] %v1489
    %1506 = vst [vmem:[#allocation14 + $0x8] sm:$0xff] %v1490
    %1507 = vst [vmem:[#allocation14 + $0x10] sm:$0xff] %v1491
    %1508 = vst [vmem:[#allocation14 + $0x18] sm:$0xff] %v1492
    %1509 = vst [vmem:[#allocation14 + $0x20] sm:$0xff] %v1493
    %1510 = vst [vmem:[#allocation14 + $0x28] sm:$0xff] %v1494
    %1511 = vst [vmem:[#allocation14 + $0x30] sm:$0xff] %v1495
    %1512 = vst [vmem:[#allocation14 + $0x38] sm:$0xff] %v1496
    %1513 = vst [vmem:[#allocation14 + $0x40] sm:$0xff] %v1497
    %1514 = vst [vmem:[#allocation14 + $0x48] sm:$0xff] %v1498
    %1515 = vst [vmem:[#allocation14 + $0x50] sm:$0xff] %v1499
    %1516 = vst [vmem:[#allocation14 + $0x58] sm:$0xff] %v1500
    %1517 = vst [vmem:[#allocation14 + $0x60] sm:$0xff] %v1501
    %1518 = vst [vmem:[#allocation14 + $0x68] sm:$0xff] %v1502
    %1519 = vst [vmem:[#allocation14 + $0x70] sm:$0xff] %v1503
    %1520 = vst [vmem:[#allocation14 + $0x78] sm:$0xff] %v1504
    // Predicated region
    $region58: #{_ffn_impl.1} parent=1 // pred_check
      _
    $region59: #{_ffn_impl.1} parent=1 // pred_check_branch
      %1522 = sbr.rel (0) target = $region61
    $region60: #{_ffn_impl.1} parent=1 // pred_region
      %s1524 = ssub.s32 2048, 2048
      %1525 = vsyncadd [#allocation4], %s1524
      %s1526 = sshll.u32 [#allocation14], 4
      %s1527 = int_to_ptr.vmem [resolvable:$true] %s1526
      %1532 = dma.vmem_to_hbm [thread:$0]  %s1527, 2048, %s7, [#allocation4], 128, 128, 8
    $region61: #{_ffn_impl.1} parent=1 // pred_fallthru
      _
    // Predicated region
    $region62: #{_ffn_impl.1} parent=1 // pred_check
      _
    $region63: #{_ffn_impl.1} parent=1 // pred_check_branch
      %1534 = sbr.rel (0) target = $region65
    $region64: #{_ffn_impl.1} parent=1 // pred_region
      %1535 = dma.done [#allocation4], 2048
    $region65: #{_ffn_impl.1} parent=1 // pred_fallthru
      _
    %1536 = vsyncpa [#allocation3], 1
    %1537 = vsyncpa [#allocation6], 1
    %1538 = vsyncpa [#allocation9], 1
    %1539 = vsyncpa [#allocation12], 1
    %1540 = vsyncpa [#allocation4], 1

</llo_original>
